<compile_context>
chip_gen: v6e
topology: v6e:2x2x1
jax: 0.10.0
libtpu: 0.0.40
codegen_flags: <defaults>
</compile_context>

<pallas_src>
import math
import functools

import jax
import jax.numpy as jnp
from jax.experimental import pallas as pl
from jax.experimental.pallas import tpu as pltpu


# ------------------------------- Pallas kernel -------------------------------

def _mha_fused_kernel(x_ref, w_qkv_ref, b_qkv_ref, w_o_ref, b_o_ref,
                      out_ref, attn_w_ref,
                      q_sc, k_sc, v_sc, a_sc,
                      *, n_head, head_dim, n_embd):
    H, Dh, E = n_head, head_dim, n_embd
    S = x_ref.shape[1]

    x = x_ref[0]                                                       # (S, E) bf16

    # Fused QKV projection: one wide MXU matmul, f32 accumulation.
    # (1/sqrt(Dh) is already folded into the Q columns of w_qkv / b_qkv host-side.)
    qkv = jnp.dot(x, w_qkv_ref[...],
                  preferred_element_type=jnp.float32) + b_qkv_ref[...]  # (S, 3E) f32

    # Restructure to head-major (H, S, Dh) via VMEM scratch (static slices only; avoids
    # in-kernel reshape/transpose of the tiled dims).
    for h in range(H):
        lo = h * Dh
        q_sc[h] = qkv[:, lo:lo + Dh]
        k_sc[h] = qkv[:, E + lo:E + lo + Dh]
        v_sc[h] = qkv[:, 2 * E + lo:2 * E + lo + Dh]

    qh = q_sc[...].astype(jnp.bfloat16)                                # (H, S, Dh)
    kh = k_sc[...].astype(jnp.bfloat16)
    vh = v_sc[...].astype(jnp.bfloat16)

    # Scores for ALL heads in one batched MXU pass (no per-head tiny matmuls, no k.T).
    scores = jnp.einsum('hqd,hkd->hqk', qh, kh,
                        preferred_element_type=jnp.float32)            # (H, S, S) f32

    # Numerically stable softmax, all in f32 (VPU); approximate reciprocal on the EUP.
    m = jnp.max(scores, axis=-1, keepdims=True)
    e = jnp.exp(scores - m)
    w = e * pl.reciprocal(jnp.sum(e, axis=-1, keepdims=True), approx=True)

    attn_w_ref[0] = w                                                  # one full-block store
    # TODO(synk): attn_pdrop dropout would mask `w` here (eval-mode identity today).

    # P @ V for all heads, batched on the MXU.
    ao = jnp.einsum('hqk,hkd->hqd', w.astype(jnp.bfloat16), vh,
                    preferred_element_type=jnp.float32)                # (H, S, Dh) f32

    # Reproduce torch's `.contiguous().view(B, S, E)` (heads NOT transposed back):
    # scatter Dh-wide row pieces of the raw (H, S, Dh) buffer into an (S, E) VMEM slab.
    for h in range(H):
        ao_h = ao[h]                                                   # (S, Dh)
        for s in range(S):
            flat = (h * S + s) * Dh
            r, c = flat // E, flat % E
            a_sc[r:r + 1, c:c + Dh] = ao_h[s:s + 1, :]

    # Fused output projection (no HBM round trip of the attention context).
    out_ref[0] = (jnp.dot(a_sc[...].astype(jnp.bfloat16), w_o_ref[...],
                          preferred_element_type=jnp.float32) + b_o_ref[...])


# ------------------------------- Python wrapper -------------------------------

def multi_head_attention(x, params, n_head):
    """x: (B, S, E) float32.  Returns (output (B, S, E), attn_weights (B, H, S, S))."""
    B, S, E = x.shape
    H = n_head
    Dh = E // H
    inv_scale = 1.0 / math.sqrt(Dh)

    # Host-side (one-time) operand prep: fuse QKV into a single (E, 3E) weight, fold the
    # 1/sqrt(Dh) score scaling into the Q columns, cast matmul operands to bf16.
    w_qkv = jnp.concatenate(
        [params["wq"] * inv_scale, params["wk"], params["wv"]], axis=1
    ).astype(jnp.bfloat16)                                             # (E, 3E)
    b_qkv = jnp.concatenate(
        [params["bq"] * inv_scale, params["bk"], params["bv"]]
    ).reshape(1, 3 * E).astype(jnp.float32)                            # (1, 3E)
    w_o = params["wo"].astype(jnp.bfloat16)                            # (E, E)
    b_o = params["bo"].reshape(1, E).astype(jnp.float32)               # (1, E)
    x_bf16 = x.astype(jnp.bfloat16)

    kernel = functools.partial(_mha_fused_kernel, n_head=H, head_dim=Dh, n_embd=E)

    out, attn_w = pl.pallas_call(
        kernel,
        out_shape=(jax.ShapeDtypeStruct((B, S, E), jnp.float32),
                   jax.ShapeDtypeStruct((B, H, S, S), jnp.float32)),
        grid=(B,),
        in_specs=[
            pl.BlockSpec((1, S, E), lambda b: (b, 0, 0)),      # x
            pl.BlockSpec((E, 3 * E), lambda b: (0, 0)),        # fused W_QKV
            pl.BlockSpec((1, 3 * E), lambda b: (0, 0)),        # fused b_QKV
            pl.BlockSpec((E, E), lambda b: (0, 0)),            # W_out
            pl.BlockSpec((1, E), lambda b: (0, 0)),            # b_out
        ],
        out_specs=(pl.BlockSpec((1, S, E), lambda b: (b, 0, 0)),
                   pl.BlockSpec((1, H, S, S), lambda b: (b, 0, 0, 0))),
        scratch_shapes=[
            pltpu.VMEM((H, S, Dh), jnp.float32),               # q heads
            pltpu.VMEM((H, S, Dh), jnp.float32),               # k heads
            pltpu.VMEM((H, S, Dh), jnp.float32),               # v heads
            pltpu.VMEM((S, E), jnp.float32),                   # flattened "view" slab
        ],
        compiler_params=pltpu.CompilerParams(
            dimension_semantics=("parallel",),
            vmem_limit_bytes=32 * 1024 * 1024),
    )(x_bf16, w_qkv, b_qkv, w_o, b_o)

    return out, attn_w


# --------------------------- reference (pure JAX, f32) ---------------------------

def multi_head_attention_ref(x, params, n_head):
    B, S, E = x.shape
    Dh = E // n_head
    scale = math.sqrt(Dh)
    q = x @ params["wq"] + params["bq"]
    k = x @ params["wk"] + params["bk"]
    v = x @ params["wv"] + params["bv"]
    qh = q.reshape(B, S, n_head, Dh).transpose(0, 2, 1, 3)
    kh = k.reshape(B, S, n_head, Dh).transpose(0, 2, 1, 3)
    vh = v.reshape(B, S, n_head, Dh).transpose(0, 2, 1, 3)
    scores = jnp.einsum("bhqd,bhkd->bhqk", qh, kh) / scale
    w = jax.nn.softmax(scores, axis=-1)
    ao = jnp.einsum("bhqk,bhkd->bhqd", w, vh)          # (B, H, S, Dh)
    ao = ao.reshape(B, S, E)                            # same "view" as the PyTorch code
    out = ao @ params["wo"] + params["bo"]
    return out, w


# ------------------------------------- main -------------------------------------

if __name__ == "__main__":
    B, S, E, H = 2, 8, 32, 4          # batch, seq, n_embd, n_head  (head_dim = 8)
    attn_pdrop = 0.1                  # unused (eval-mode dropout == identity)

    key = jax.random.PRNGKey(0)
    ks = jax.random.split(key, 9)

    # PyTorch nn.Linear default init: U(-1/sqrt(fan_in), 1/sqrt(fan_in))
    bound = 1.0 / math.sqrt(E)
    u = lambda k, shp: jax.random.uniform(k, shp, jnp.float32, -bound, bound)

    params = {
        "wq": u(ks[0], (E, E)), "bq": u(ks[1], (E,)),
        "wk": u(ks[2], (E, E)), "bk": u(ks[3], (E,)),
        "wv": u(ks[4], (E, E)), "bv": u(ks[5], (E,)),
        "wo": u(ks[6], (E, E)), "bo": u(ks[7], (E,)),
    }
    x = jax.random.normal(ks[8], (B, S, E), jnp.float32)

    out, attn_w = multi_head_attention(x, params, H)
    out = jax.block_until_ready(out)
    attn_w = jax.block_until_ready(attn_w)

    out_ref, attn_w_ref = multi_head_attention_ref(x, params, H)

    assert out.shape == (B, S, E) and attn_w.shape == (B, H, S, S)
    # bf16 MXU operands + approx reciprocal -> compare against the f32 reference with
    # bf16-level tolerances (accumulation and softmax are still f32).
    assert jnp.allclose(out, out_ref, rtol=5e-2, atol=5e-2)
    assert jnp.allclose(attn_w, attn_w_ref, rtol=2e-2, atol=2e-2)

    print("KERNEL_OK")
</pallas_src>

<mosaic_0001>
module attributes {stable_mosaic.version = 11 : i64} {
  func.func @_mha_fused_kernel(%arg0: i32, %arg1: memref<1x8x32xbf16, #tpu.memory_space<vmem>>, %arg2: memref<32x96xbf16, #tpu.memory_space<vmem>>, %arg3: memref<1x96xf32, #tpu.memory_space<vmem>>, %arg4: memref<32x32xbf16, #tpu.memory_space<vmem>>, %arg5: memref<1x32xf32, #tpu.memory_space<vmem>>, %arg6: memref<1x8x32xf32, #tpu.memory_space<vmem>>, %arg7: memref<1x4x8x8xf32, #tpu.memory_space<vmem>>, %arg8: memref<4x8x8xf32, #tpu.memory_space<vmem>>, %arg9: memref<4x8x8xf32, #tpu.memory_space<vmem>>, %arg10: memref<4x8x8xf32, #tpu.memory_space<vmem>>, %arg11: memref<8x32xf32, #tpu.memory_space<vmem>>) attributes {dimension_semantics = [#tpu.dimension_semantics<parallel>], iteration_bounds = array<i64: 2>, scalar_prefetch = 0 : i64, scratch_operands = 4 : i64, tpu.core_type = #tpu.core_type<tc>, window_params = [{transform_indices = @transform_0, window_bounds = array<i64: 1, 8, 32>}, {pipeline_mode = #tpu.pipeline_mode<synchronous>, transform_indices = @transform_1, window_bounds = array<i64: 32, 96>}, {pipeline_mode = #tpu.pipeline_mode<synchronous>, transform_indices = @transform_2, window_bounds = array<i64: 1, 96>}, {pipeline_mode = #tpu.pipeline_mode<synchronous>, transform_indices = @transform_3, window_bounds = array<i64: 32, 32>}, {pipeline_mode = #tpu.pipeline_mode<synchronous>, transform_indices = @transform_4, window_bounds = array<i64: 1, 32>}, {transform_indices = @transform_5, window_bounds = array<i64: 1, 8, 32>}, {transform_indices = @transform_6, window_bounds = array<i64: 1, 4, 8, 8>}]} {
    %c0 = arith.constant 0 : index
    %c0_0 = arith.constant 0 : index
    %c0_1 = arith.constant 0 : index
    %0 = vector.load %arg1[%c0, %c0_0, %c0_1] : memref<1x8x32xbf16, #tpu.memory_space<vmem>>, vector<1x8x32xbf16>
    %1 = vector.shape_cast %0 : vector<1x8x32xbf16> to vector<8x32xbf16>
    %c0_2 = arith.constant 0 : index
    %c0_3 = arith.constant 0 : index
    %2 = vector.load %arg2[%c0_2, %c0_3] : memref<32x96xbf16, #tpu.memory_space<vmem>>, vector<32x96xbf16>
    %cst = arith.constant dense<0.000000e+00> : vector<8x96xf32>
    %3 = tpu.matmul %1, %2, %cst {dimension_numbers = #tpu.dot_dimension_numbers<[1], [0], [0], [1], [0, 0, 1, 1], [], []>} : vector<8x32xbf16>, vector<32x96xbf16>, vector<8x96xf32> -> vector<8x96xf32>
    %c0_4 = arith.constant 0 : index
    %c0_5 = arith.constant 0 : index
    %4 = vector.load %arg3[%c0_4, %c0_5] : memref<1x96xf32, #tpu.memory_space<vmem>>, vector<1x96xf32>
    %5 = vector.broadcast %4 : vector<1x96xf32> to vector<8x96xf32>
    %6 = arith.addf %3, %5 : vector<8x96xf32>
    %7 = vector.extract_strided_slice %6 {offsets = [0, 0], sizes = [8, 8], strides = [1, 1]} : vector<8x96xf32> to vector<8x8xf32>
    %c0_6 = arith.constant 0 : index
    %c0_7 = arith.constant 0 : index
    %c0_8 = arith.constant 0 : index
    %8 = vector.load %arg8[%c0_6, %c0_7, %c0_8] : memref<4x8x8xf32, #tpu.memory_space<vmem>>, vector<1x8x8xf32>
    %9 = vector.shape_cast %8 : vector<1x8x8xf32> to vector<8x8xf32>
    %10 = vector.shape_cast %7 : vector<8x8xf32> to vector<1x8x8xf32>
    tpu.vector_store %arg8[%c0_6, %c0_7, %c0_8], %10 {strides = array<i32>} : memref<4x8x8xf32, #tpu.memory_space<vmem>>, vector<1x8x8xf32>,
    %11 = vector.extract_strided_slice %6 {offsets = [0, 32], sizes = [8, 8], strides = [1, 1]} : vector<8x96xf32> to vector<8x8xf32>
    %c0_9 = arith.constant 0 : index
    %c0_10 = arith.constant 0 : index
    %c0_11 = arith.constant 0 : index
    %12 = vector.load %arg9[%c0_9, %c0_10, %c0_11] : memref<4x8x8xf32, #tpu.memory_space<vmem>>, vector<1x8x8xf32>
    %13 = vector.shape_cast %12 : vector<1x8x8xf32> to vector<8x8xf32>
    %14 = vector.shape_cast %11 : vector<8x8xf32> to vector<1x8x8xf32>
    tpu.vector_store %arg9[%c0_9, %c0_10, %c0_11], %14 {strides = array<i32>} : memref<4x8x8xf32, #tpu.memory_space<vmem>>, vector<1x8x8xf32>,
    %15 = vector.extract_strided_slice %6 {offsets = [0, 64], sizes = [8, 8], strides = [1, 1]} : vector<8x96xf32> to vector<8x8xf32>
    %c0_12 = arith.constant 0 : index
    %c0_13 = arith.constant 0 : index
    %c0_14 = arith.constant 0 : index
    %16 = vector.load %arg10[%c0_12, %c0_13, %c0_14] : memref<4x8x8xf32, #tpu.memory_space<vmem>>, vector<1x8x8xf32>
    %17 = vector.shape_cast %16 : vector<1x8x8xf32> to vector<8x8xf32>
    %18 = vector.shape_cast %15 : vector<8x8xf32> to vector<1x8x8xf32>
    tpu.vector_store %arg10[%c0_12, %c0_13, %c0_14], %18 {strides = array<i32>} : memref<4x8x8xf32, #tpu.memory_space<vmem>>, vector<1x8x8xf32>,
    %19 = vector.extract_strided_slice %6 {offsets = [0, 8], sizes = [8, 8], strides = [1, 1]} : vector<8x96xf32> to vector<8x8xf32>
    %c1 = arith.constant 1 : index
    %c0_15 = arith.constant 0 : index
    %c0_16 = arith.constant 0 : index
    %20 = vector.load %arg8[%c1, %c0_15, %c0_16] : memref<4x8x8xf32, #tpu.memory_space<vmem>>, vector<1x8x8xf32>
    %21 = vector.shape_cast %20 : vector<1x8x8xf32> to vector<8x8xf32>
    %22 = vector.shape_cast %19 : vector<8x8xf32> to vector<1x8x8xf32>
    tpu.vector_store %arg8[%c1, %c0_15, %c0_16], %22 {strides = array<i32>} : memref<4x8x8xf32, #tpu.memory_space<vmem>>, vector<1x8x8xf32>,
    %23 = vector.extract_strided_slice %6 {offsets = [0, 40], sizes = [8, 8], strides = [1, 1]} : vector<8x96xf32> to vector<8x8xf32>
    %c1_17 = arith.constant 1 : index
    %c0_18 = arith.constant 0 : index
    %c0_19 = arith.constant 0 : index
    %24 = vector.load %arg9[%c1_17, %c0_18, %c0_19] : memref<4x8x8xf32, #tpu.memory_space<vmem>>, vector<1x8x8xf32>
    %25 = vector.shape_cast %24 : vector<1x8x8xf32> to vector<8x8xf32>
    %26 = vector.shape_cast %23 : vector<8x8xf32> to vector<1x8x8xf32>
    tpu.vector_store %arg9[%c1_17, %c0_18, %c0_19], %26 {strides = array<i32>} : memref<4x8x8xf32, #tpu.memory_space<vmem>>, vector<1x8x8xf32>,
    %27 = vector.extract_strided_slice %6 {offsets = [0, 72], sizes = [8, 8], strides = [1, 1]} : vector<8x96xf32> to vector<8x8xf32>
    %c1_20 = arith.constant 1 : index
    %c0_21 = arith.constant 0 : index
    %c0_22 = arith.constant 0 : index
    %28 = vector.load %arg10[%c1_20, %c0_21, %c0_22] : memref<4x8x8xf32, #tpu.memory_space<vmem>>, vector<1x8x8xf32>
    %29 = vector.shape_cast %28 : vector<1x8x8xf32> to vector<8x8xf32>
    %30 = vector.shape_cast %27 : vector<8x8xf32> to vector<1x8x8xf32>
    tpu.vector_store %arg10[%c1_20, %c0_21, %c0_22], %30 {strides = array<i32>} : memref<4x8x8xf32, #tpu.memory_space<vmem>>, vector<1x8x8xf32>,
    %31 = vector.extract_strided_slice %6 {offsets = [0, 16], sizes = [8, 8], strides = [1, 1]} : vector<8x96xf32> to vector<8x8xf32>
    %c2 = arith.constant 2 : index
    %c0_23 = arith.constant 0 : index
    %c0_24 = arith.constant 0 : index
    %32 = vector.load %arg8[%c2, %c0_23, %c0_24] : memref<4x8x8xf32, #tpu.memory_space<vmem>>, vector<1x8x8xf32>
    %33 = vector.shape_cast %32 : vector<1x8x8xf32> to vector<8x8xf32>
    %34 = vector.shape_cast %31 : vector<8x8xf32> to vector<1x8x8xf32>
    tpu.vector_store %arg8[%c2, %c0_23, %c0_24], %34 {strides = array<i32>} : memref<4x8x8xf32, #tpu.memory_space<vmem>>, vector<1x8x8xf32>,
    %35 = vector.extract_strided_slice %6 {offsets = [0, 48], sizes = [8, 8], strides = [1, 1]} : vector<8x96xf32> to vector<8x8xf32>
    %c2_25 = arith.constant 2 : index
    %c0_26 = arith.constant 0 : index
    %c0_27 = arith.constant 0 : index
    %36 = vector.load %arg9[%c2_25, %c0_26, %c0_27] : memref<4x8x8xf32, #tpu.memory_space<vmem>>, vector<1x8x8xf32>
    %37 = vector.shape_cast %36 : vector<1x8x8xf32> to vector<8x8xf32>
    %38 = vector.shape_cast %35 : vector<8x8xf32> to vector<1x8x8xf32>
    tpu.vector_store %arg9[%c2_25, %c0_26, %c0_27], %38 {strides = array<i32>} : memref<4x8x8xf32, #tpu.memory_space<vmem>>, vector<1x8x8xf32>,
    %39 = vector.extract_strided_slice %6 {offsets = [0, 80], sizes = [8, 8], strides = [1, 1]} : vector<8x96xf32> to vector<8x8xf32>
    %c2_28 = arith.constant 2 : index
    %c0_29 = arith.constant 0 : index
    %c0_30 = arith.constant 0 : index
    %40 = vector.load %arg10[%c2_28, %c0_29, %c0_30] : memref<4x8x8xf32, #tpu.memory_space<vmem>>, vector<1x8x8xf32>
    %41 = vector.shape_cast %40 : vector<1x8x8xf32> to vector<8x8xf32>
    %42 = vector.shape_cast %39 : vector<8x8xf32> to vector<1x8x8xf32>
    tpu.vector_store %arg10[%c2_28, %c0_29, %c0_30], %42 {strides = array<i32>} : memref<4x8x8xf32, #tpu.memory_space<vmem>>, vector<1x8x8xf32>,
    %43 = vector.extract_strided_slice %6 {offsets = [0, 24], sizes = [8, 8], strides = [1, 1]} : vector<8x96xf32> to vector<8x8xf32>
    %c3 = arith.constant 3 : index
    %c0_31 = arith.constant 0 : index
    %c0_32 = arith.constant 0 : index
    %44 = vector.load %arg8[%c3, %c0_31, %c0_32] : memref<4x8x8xf32, #tpu.memory_space<vmem>>, vector<1x8x8xf32>
    %45 = vector.shape_cast %44 : vector<1x8x8xf32> to vector<8x8xf32>
    %46 = vector.shape_cast %43 : vector<8x8xf32> to vector<1x8x8xf32>
    tpu.vector_store %arg8[%c3, %c0_31, %c0_32], %46 {strides = array<i32>} : memref<4x8x8xf32, #tpu.memory_space<vmem>>, vector<1x8x8xf32>,
    %47 = vector.extract_strided_slice %6 {offsets = [0, 56], sizes = [8, 8], strides = [1, 1]} : vector<8x96xf32> to vector<8x8xf32>
    %c3_33 = arith.constant 3 : index
    %c0_34 = arith.constant 0 : index
    %c0_35 = arith.constant 0 : index
    %48 = vector.load %arg9[%c3_33, %c0_34, %c0_35] : memref<4x8x8xf32, #tpu.memory_space<vmem>>, vector<1x8x8xf32>
    %49 = vector.shape_cast %48 : vector<1x8x8xf32> to vector<8x8xf32>
    %50 = vector.shape_cast %47 : vector<8x8xf32> to vector<1x8x8xf32>
    tpu.vector_store %arg9[%c3_33, %c0_34, %c0_35], %50 {strides = array<i32>} : memref<4x8x8xf32, #tpu.memory_space<vmem>>, vector<1x8x8xf32>,
    %51 = vector.extract_strided_slice %6 {offsets = [0, 88], sizes = [8, 8], strides = [1, 1]} : vector<8x96xf32> to vector<8x8xf32>
    %c3_36 = arith.constant 3 : index
    %c0_37 = arith.constant 0 : index
    %c0_38 = arith.constant 0 : index
    %52 = vector.load %arg10[%c3_36, %c0_37, %c0_38] : memref<4x8x8xf32, #tpu.memory_space<vmem>>, vector<1x8x8xf32>
    %53 = vector.shape_cast %52 : vector<1x8x8xf32> to vector<8x8xf32>
    %54 = vector.shape_cast %51 : vector<8x8xf32> to vector<1x8x8xf32>
    tpu.vector_store %arg10[%c3_36, %c0_37, %c0_38], %54 {strides = array<i32>} : memref<4x8x8xf32, #tpu.memory_space<vmem>>, vector<1x8x8xf32>,
    %c0_39 = arith.constant 0 : index
    %c0_40 = arith.constant 0 : index
    %c0_41 = arith.constant 0 : index
    %55 = vector.load %arg8[%c0_39, %c0_40, %c0_41] : memref<4x8x8xf32, #tpu.memory_space<vmem>>, vector<4x8x8xf32>
    %56 = arith.truncf %55 : vector<4x8x8xf32> to vector<4x8x8xbf16>
    %c0_42 = arith.constant 0 : index
    %c0_43 = arith.constant 0 : index
    %c0_44 = arith.constant 0 : index
    %57 = vector.load %arg9[%c0_42, %c0_43, %c0_44] : memref<4x8x8xf32, #tpu.memory_space<vmem>>, vector<4x8x8xf32>
    %58 = arith.truncf %57 : vector<4x8x8xf32> to vector<4x8x8xbf16>
    %c0_45 = arith.constant 0 : index
    %c0_46 = arith.constant 0 : index
    %c0_47 = arith.constant 0 : index
    %59 = vector.load %arg10[%c0_45, %c0_46, %c0_47] : memref<4x8x8xf32, #tpu.memory_space<vmem>>, vector<4x8x8xf32>
    %60 = arith.truncf %59 : vector<4x8x8xf32> to vector<4x8x8xbf16>
    "tpu.trace_start"() <{level = 10 : i32, message = "hqd,hkd->hqk"}> : () -> ()
    %cst_48 = arith.constant dense<0.000000e+00> : vector<4x8x8xf32>
    %61 = tpu.matmul %56, %58, %cst_48 {dimension_numbers = #tpu.dot_dimension_numbers<[2], [2], [1], [1], [0, 0, 0, 1, 1, 1], [0], [0]>} : vector<4x8x8xbf16>, vector<4x8x8xbf16>, vector<4x8x8xf32> -> vector<4x8x8xf32>
    "tpu.trace_stop"() : () -> ()
    %cst_49 = arith.constant dense<0xFF800000> : vector<4x8xf32>
    %62 = vector.multi_reduction <maximumf>, %61, %cst_49 [2] : vector<4x8x8xf32> to vector<4x8xf32>
    %63 = vector.shape_cast %62 : vector<4x8xf32> to vector<4x8x1xf32>
    %64 = vector.broadcast %63 : vector<4x8x1xf32> to vector<4x8x8xf32>
    %65 = arith.subf %61, %64 : vector<4x8x8xf32>
    %66 = math.exp %65 : vector<4x8x8xf32>
    %cst_50 = arith.constant dense<0.000000e+00> : vector<4x8xf32>
    %67 = vector.multi_reduction <add>, %66, %cst_50 [2] : vector<4x8x8xf32> to vector<4x8xf32>
    %68 = vector.shape_cast %67 : vector<4x8xf32> to vector<4x8x1xf32>
    %69 = tpu.reciprocal %68 {approx = true} : vector<4x8x1xf32> -> vector<4x8x1xf32>
    %70 = vector.broadcast %69 : vector<4x8x1xf32> to vector<4x8x8xf32>
    %71 = arith.mulf %66, %70 : vector<4x8x8xf32>
    %c0_51 = arith.constant 0 : index
    %c0_52 = arith.constant 0 : index
    %c0_53 = arith.constant 0 : index
    %c0_54 = arith.constant 0 : index
    %72 = vector.load %arg7[%c0_51, %c0_52, %c0_53, %c0_54] : memref<1x4x8x8xf32, #tpu.memory_space<vmem>>, vector<1x4x8x8xf32>
    %73 = vector.shape_cast %72 : vector<1x4x8x8xf32> to vector<4x8x8xf32>
    %74 = vector.shape_cast %71 : vector<4x8x8xf32> to vector<1x4x8x8xf32>
    tpu.vector_store %arg7[%c0_51, %c0_52, %c0_53, %c0_54], %74 {strides = array<i32>} : memref<1x4x8x8xf32, #tpu.memory_space<vmem>>, vector<1x4x8x8xf32>,
    %75 = arith.truncf %71 : vector<4x8x8xf32> to vector<4x8x8xbf16>
    "tpu.trace_start"() <{level = 10 : i32, message = "hqk,hkd->hqd"}> : () -> ()
    %cst_55 = arith.constant dense<0.000000e+00> : vector<4x8x8xf32>
    %76 = tpu.matmul %75, %60, %cst_55 {dimension_numbers = #tpu.dot_dimension_numbers<[2], [1], [1], [2], [0, 0, 0, 1, 1, 2], [0], [0]>} : vector<4x8x8xbf16>, vector<4x8x8xbf16>, vector<4x8x8xf32> -> vector<4x8x8xf32>
    "tpu.trace_stop"() : () -> ()
    %77 = vector.extract_strided_slice %76 {offsets = [0, 0, 0], sizes = [1, 8, 8], strides = [1, 1, 1]} : vector<4x8x8xf32> to vector<1x8x8xf32>
    %78 = vector.shape_cast %77 : vector<1x8x8xf32> to vector<8x8xf32>
    %79 = vector.extract_strided_slice %78 {offsets = [0, 0], sizes = [1, 8], strides = [1, 1]} : vector<8x8xf32> to vector<1x8xf32>
    %c0_56 = arith.constant 0 : index
    %c0_57 = arith.constant 0 : index
    %80 = vector.load %arg11[%c0_56, %c0_57] : memref<8x32xf32, #tpu.memory_space<vmem>>, vector<1x8xf32>
    tpu.vector_store %arg11[%c0_56, %c0_57], %79 {strides = array<i32>} : memref<8x32xf32, #tpu.memory_space<vmem>>, vector<1x8xf32>,
    %81 = vector.extract_strided_slice %78 {offsets = [1, 0], sizes = [1, 8], strides = [1, 1]} : vector<8x8xf32> to vector<1x8xf32>
    %c0_58 = arith.constant 0 : index
    %c8 = arith.constant 8 : index
    %82 = vector.load %arg11[%c0_58, %c8] : memref<8x32xf32, #tpu.memory_space<vmem>>, vector<1x8xf32>
    tpu.vector_store %arg11[%c0_58, %c8], %81 {strides = array<i32>} : memref<8x32xf32, #tpu.memory_space<vmem>>, vector<1x8xf32>,
    %83 = vector.extract_strided_slice %78 {offsets = [2, 0], sizes = [1, 8], strides = [1, 1]} : vector<8x8xf32> to vector<1x8xf32>
    %c0_59 = arith.constant 0 : index
    %c16 = arith.constant 16 : index
    %84 = vector.load %arg11[%c0_59, %c16] : memref<8x32xf32, #tpu.memory_space<vmem>>, vector<1x8xf32>
    tpu.vector_store %arg11[%c0_59, %c16], %83 {strides = array<i32>} : memref<8x32xf32, #tpu.memory_space<vmem>>, vector<1x8xf32>,
    %85 = vector.extract_strided_slice %78 {offsets = [3, 0], sizes = [1, 8], strides = [1, 1]} : vector<8x8xf32> to vector<1x8xf32>
    %c0_60 = arith.constant 0 : index
    %c24 = arith.constant 24 : index
    %86 = vector.load %arg11[%c0_60, %c24] : memref<8x32xf32, #tpu.memory_space<vmem>>, vector<1x8xf32>
    tpu.vector_store %arg11[%c0_60, %c24], %85 {strides = array<i32>} : memref<8x32xf32, #tpu.memory_space<vmem>>, vector<1x8xf32>,
    %87 = vector.extract_strided_slice %78 {offsets = [4, 0], sizes = [1, 8], strides = [1, 1]} : vector<8x8xf32> to vector<1x8xf32>
    %c1_61 = arith.constant 1 : index
    %c0_62 = arith.constant 0 : index
    %88 = vector.load %arg11[%c1_61, %c0_62] : memref<8x32xf32, #tpu.memory_space<vmem>>, vector<1x8xf32>
    tpu.vector_store %arg11[%c1_61, %c0_62], %87 {strides = array<i32>} : memref<8x32xf32, #tpu.memory_space<vmem>>, vector<1x8xf32>,
    %89 = vector.extract_strided_slice %78 {offsets = [5, 0], sizes = [1, 8], strides = [1, 1]} : vector<8x8xf32> to vector<1x8xf32>
    %c1_63 = arith.constant 1 : index
    %c8_64 = arith.constant 8 : index
    %90 = vector.load %arg11[%c1_63, %c8_64] : memref<8x32xf32, #tpu.memory_space<vmem>>, vector<1x8xf32>
    tpu.vector_store %arg11[%c1_63, %c8_64], %89 {strides = array<i32>} : memref<8x32xf32, #tpu.memory_space<vmem>>, vector<1x8xf32>,
    %91 = vector.extract_strided_slice %78 {offsets = [6, 0], sizes = [1, 8], strides = [1, 1]} : vector<8x8xf32> to vector<1x8xf32>
    %c1_65 = arith.constant 1 : index
    %c16_66 = arith.constant 16 : index
    %92 = vector.load %arg11[%c1_65, %c16_66] : memref<8x32xf32, #tpu.memory_space<vmem>>, vector<1x8xf32>
    tpu.vector_store %arg11[%c1_65, %c16_66], %91 {strides = array<i32>} : memref<8x32xf32, #tpu.memory_space<vmem>>, vector<1x8xf32>,
    %93 = vector.extract_strided_slice %78 {offsets = [7, 0], sizes = [1, 8], strides = [1, 1]} : vector<8x8xf32> to vector<1x8xf32>
    %c1_67 = arith.constant 1 : index
    %c24_68 = arith.constant 24 : index
    %94 = vector.load %arg11[%c1_67, %c24_68] : memref<8x32xf32, #tpu.memory_space<vmem>>, vector<1x8xf32>
    tpu.vector_store %arg11[%c1_67, %c24_68], %93 {strides = array<i32>} : memref<8x32xf32, #tpu.memory_space<vmem>>, vector<1x8xf32>,
    %95 = vector.extract_strided_slice %76 {offsets = [1, 0, 0], sizes = [1, 8, 8], strides = [1, 1, 1]} : vector<4x8x8xf32> to vector<1x8x8xf32>
    %96 = vector.shape_cast %95 : vector<1x8x8xf32> to vector<8x8xf32>
    %97 = vector.extract_strided_slice %96 {offsets = [0, 0], sizes = [1, 8], strides = [1, 1]} : vector<8x8xf32> to vector<1x8xf32>
    %c2_69 = arith.constant 2 : index
    %c0_70 = arith.constant 0 : index
    %98 = vector.load %arg11[%c2_69, %c0_70] : memref<8x32xf32, #tpu.memory_space<vmem>>, vector<1x8xf32>
    tpu.vector_store %arg11[%c2_69, %c0_70], %97 {strides = array<i32>} : memref<8x32xf32, #tpu.memory_space<vmem>>, vector<1x8xf32>,
    %99 = vector.extract_strided_slice %96 {offsets = [1, 0], sizes = [1, 8], strides = [1, 1]} : vector<8x8xf32> to vector<1x8xf32>
    %c2_71 = arith.constant 2 : index
    %c8_72 = arith.constant 8 : index
    %100 = vector.load %arg11[%c2_71, %c8_72] : memref<8x32xf32, #tpu.memory_space<vmem>>, vector<1x8xf32>
    tpu.vector_store %arg11[%c2_71, %c8_72], %99 {strides = array<i32>} : memref<8x32xf32, #tpu.memory_space<vmem>>, vector<1x8xf32>,
    %101 = vector.extract_strided_slice %96 {offsets = [2, 0], sizes = [1, 8], strides = [1, 1]} : vector<8x8xf32> to vector<1x8xf32>
    %c2_73 = arith.constant 2 : index
    %c16_74 = arith.constant 16 : index
    %102 = vector.load %arg11[%c2_73, %c16_74] : memref<8x32xf32, #tpu.memory_space<vmem>>, vector<1x8xf32>
    tpu.vector_store %arg11[%c2_73, %c16_74], %101 {strides = array<i32>} : memref<8x32xf32, #tpu.memory_space<vmem>>, vector<1x8xf32>,
    %103 = vector.extract_strided_slice %96 {offsets = [3, 0], sizes = [1, 8], strides = [1, 1]} : vector<8x8xf32> to vector<1x8xf32>
    %c2_75 = arith.constant 2 : index
    %c24_76 = arith.constant 24 : index
    %104 = vector.load %arg11[%c2_75, %c24_76] : memref<8x32xf32, #tpu.memory_space<vmem>>, vector<1x8xf32>
    tpu.vector_store %arg11[%c2_75, %c24_76], %103 {strides = array<i32>} : memref<8x32xf32, #tpu.memory_space<vmem>>, vector<1x8xf32>,
    %105 = vector.extract_strided_slice %96 {offsets = [4, 0], sizes = [1, 8], strides = [1, 1]} : vector<8x8xf32> to vector<1x8xf32>
    %c3_77 = arith.constant 3 : index
    %c0_78 = arith.constant 0 : index
    %106 = vector.load %arg11[%c3_77, %c0_78] : memref<8x32xf32, #tpu.memory_space<vmem>>, vector<1x8xf32>
    tpu.vector_store %arg11[%c3_77, %c0_78], %105 {strides = array<i32>} : memref<8x32xf32, #tpu.memory_space<vmem>>, vector<1x8xf32>,
    %107 = vector.extract_strided_slice %96 {offsets = [5, 0], sizes = [1, 8], strides = [1, 1]} : vector<8x8xf32> to vector<1x8xf32>
    %c3_79 = arith.constant 3 : index
    %c8_80 = arith.constant 8 : index
    %108 = vector.load %arg11[%c3_79, %c8_80] : memref<8x32xf32, #tpu.memory_space<vmem>>, vector<1x8xf32>
    tpu.vector_store %arg11[%c3_79, %c8_80], %107 {strides = array<i32>} : memref<8x32xf32, #tpu.memory_space<vmem>>, vector<1x8xf32>,
    %109 = vector.extract_strided_slice %96 {offsets = [6, 0], sizes = [1, 8], strides = [1, 1]} : vector<8x8xf32> to vector<1x8xf32>
    %c3_81 = arith.constant 3 : index
    %c16_82 = arith.constant 16 : index
    %110 = vector.load %arg11[%c3_81, %c16_82] : memref<8x32xf32, #tpu.memory_space<vmem>>, vector<1x8xf32>
    tpu.vector_store %arg11[%c3_81, %c16_82], %109 {strides = array<i32>} : memref<8x32xf32, #tpu.memory_space<vmem>>, vector<1x8xf32>,
    %111 = vector.extract_strided_slice %96 {offsets = [7, 0], sizes = [1, 8], strides = [1, 1]} : vector<8x8xf32> to vector<1x8xf32>
    %c3_83 = arith.constant 3 : index
    %c24_84 = arith.constant 24 : index
    %112 = vector.load %arg11[%c3_83, %c24_84] : memref<8x32xf32, #tpu.memory_space<vmem>>, vector<1x8xf32>
    tpu.vector_store %arg11[%c3_83, %c24_84], %111 {strides = array<i32>} : memref<8x32xf32, #tpu.memory_space<vmem>>, vector<1x8xf32>,
    %113 = vector.extract_strided_slice %76 {offsets = [2, 0, 0], sizes = [1, 8, 8], strides = [1, 1, 1]} : vector<4x8x8xf32> to vector<1x8x8xf32>
    %114 = vector.shape_cast %113 : vector<1x8x8xf32> to vector<8x8xf32>
    %115 = vector.extract_strided_slice %114 {offsets = [0, 0], sizes = [1, 8], strides = [1, 1]} : vector<8x8xf32> to vector<1x8xf32>
    %c4 = arith.constant 4 : index
    %c0_85 = arith.constant 0 : index
    %116 = vector.load %arg11[%c4, %c0_85] : memref<8x32xf32, #tpu.memory_space<vmem>>, vector<1x8xf32>
    tpu.vector_store %arg11[%c4, %c0_85], %115 {strides = array<i32>} : memref<8x32xf32, #tpu.memory_space<vmem>>, vector<1x8xf32>,
    %117 = vector.extract_strided_slice %114 {offsets = [1, 0], sizes = [1, 8], strides = [1, 1]} : vector<8x8xf32> to vector<1x8xf32>
    %c4_86 = arith.constant 4 : index
    %c8_87 = arith.constant 8 : index
    %118 = vector.load %arg11[%c4_86, %c8_87] : memref<8x32xf32, #tpu.memory_space<vmem>>, vector<1x8xf32>
    tpu.vector_store %arg11[%c4_86, %c8_87], %117 {strides = array<i32>} : memref<8x32xf32, #tpu.memory_space<vmem>>, vector<1x8xf32>,
    %119 = vector.extract_strided_slice %114 {offsets = [2, 0], sizes = [1, 8], strides = [1, 1]} : vector<8x8xf32> to vector<1x8xf32>
    %c4_88 = arith.constant 4 : index
    %c16_89 = arith.constant 16 : index
    %120 = vector.load %arg11[%c4_88, %c16_89] : memref<8x32xf32, #tpu.memory_space<vmem>>, vector<1x8xf32>
    tpu.vector_store %arg11[%c4_88, %c16_89], %119 {strides = array<i32>} : memref<8x32xf32, #tpu.memory_space<vmem>>, vector<1x8xf32>,
    %121 = vector.extract_strided_slice %114 {offsets = [3, 0], sizes = [1, 8], strides = [1, 1]} : vector<8x8xf32> to vector<1x8xf32>
    %c4_90 = arith.constant 4 : index
    %c24_91 = arith.constant 24 : index
    %122 = vector.load %arg11[%c4_90, %c24_91] : memref<8x32xf32, #tpu.memory_space<vmem>>, vector<1x8xf32>
    tpu.vector_store %arg11[%c4_90, %c24_91], %121 {strides = array<i32>} : memref<8x32xf32, #tpu.memory_space<vmem>>, vector<1x8xf32>,
    %123 = vector.extract_strided_slice %114 {offsets = [4, 0], sizes = [1, 8], strides = [1, 1]} : vector<8x8xf32> to vector<1x8xf32>
    %c5 = arith.constant 5 : index
    %c0_92 = arith.constant 0 : index
    %124 = vector.load %arg11[%c5, %c0_92] : memref<8x32xf32, #tpu.memory_space<vmem>>, vector<1x8xf32>
    tpu.vector_store %arg11[%c5, %c0_92], %123 {strides = array<i32>} : memref<8x32xf32, #tpu.memory_space<vmem>>, vector<1x8xf32>,
    %125 = vector.extract_strided_slice %114 {offsets = [5, 0], sizes = [1, 8], strides = [1, 1]} : vector<8x8xf32> to vector<1x8xf32>
    %c5_93 = arith.constant 5 : index
    %c8_94 = arith.constant 8 : index
    %126 = vector.load %arg11[%c5_93, %c8_94] : memref<8x32xf32, #tpu.memory_space<vmem>>, vector<1x8xf32>
    tpu.vector_store %arg11[%c5_93, %c8_94], %125 {strides = array<i32>} : memref<8x32xf32, #tpu.memory_space<vmem>>, vector<1x8xf32>,
    %127 = vector.extract_strided_slice %114 {offsets = [6, 0], sizes = [1, 8], strides = [1, 1]} : vector<8x8xf32> to vector<1x8xf32>
    %c5_95 = arith.constant 5 : index
    %c16_96 = arith.constant 16 : index
    %128 = vector.load %arg11[%c5_95, %c16_96] : memref<8x32xf32, #tpu.memory_space<vmem>>, vector<1x8xf32>
    tpu.vector_store %arg11[%c5_95, %c16_96], %127 {strides = array<i32>} : memref<8x32xf32, #tpu.memory_space<vmem>>, vector<1x8xf32>,
    %129 = vector.extract_strided_slice %114 {offsets = [7, 0], sizes = [1, 8], strides = [1, 1]} : vector<8x8xf32> to vector<1x8xf32>
    %c5_97 = arith.constant 5 : index
    %c24_98 = arith.constant 24 : index
    %130 = vector.load %arg11[%c5_97, %c24_98] : memref<8x32xf32, #tpu.memory_space<vmem>>, vector<1x8xf32>
    tpu.vector_store %arg11[%c5_97, %c24_98], %129 {strides = array<i32>} : memref<8x32xf32, #tpu.memory_space<vmem>>, vector<1x8xf32>,
    %131 = vector.extract_strided_slice %76 {offsets = [3, 0, 0], sizes = [1, 8, 8], strides = [1, 1, 1]} : vector<4x8x8xf32> to vector<1x8x8xf32>
    %132 = vector.shape_cast %131 : vector<1x8x8xf32> to vector<8x8xf32>
    %133 = vector.extract_strided_slice %132 {offsets = [0, 0], sizes = [1, 8], strides = [1, 1]} : vector<8x8xf32> to vector<1x8xf32>
    %c6 = arith.constant 6 : index
    %c0_99 = arith.constant 0 : index
    %134 = vector.load %arg11[%c6, %c0_99] : memref<8x32xf32, #tpu.memory_space<vmem>>, vector<1x8xf32>
    tpu.vector_store %arg11[%c6, %c0_99], %133 {strides = array<i32>} : memref<8x32xf32, #tpu.memory_space<vmem>>, vector<1x8xf32>,
    %135 = vector.extract_strided_slice %132 {offsets = [1, 0], sizes = [1, 8], strides = [1, 1]} : vector<8x8xf32> to vector<1x8xf32>
    %c6_100 = arith.constant 6 : index
    %c8_101 = arith.constant 8 : index
    %136 = vector.load %arg11[%c6_100, %c8_101] : memref<8x32xf32, #tpu.memory_space<vmem>>, vector<1x8xf32>
    tpu.vector_store %arg11[%c6_100, %c8_101], %135 {strides = array<i32>} : memref<8x32xf32, #tpu.memory_space<vmem>>, vector<1x8xf32>,
    %137 = vector.extract_strided_slice %132 {offsets = [2, 0], sizes = [1, 8], strides = [1, 1]} : vector<8x8xf32> to vector<1x8xf32>
    %c6_102 = arith.constant 6 : index
    %c16_103 = arith.constant 16 : index
    %138 = vector.load %arg11[%c6_102, %c16_103] : memref<8x32xf32, #tpu.memory_space<vmem>>, vector<1x8xf32>
    tpu.vector_store %arg11[%c6_102, %c16_103], %137 {strides = array<i32>} : memref<8x32xf32, #tpu.memory_space<vmem>>, vector<1x8xf32>,
    %139 = vector.extract_strided_slice %132 {offsets = [3, 0], sizes = [1, 8], strides = [1, 1]} : vector<8x8xf32> to vector<1x8xf32>
    %c6_104 = arith.constant 6 : index
    %c24_105 = arith.constant 24 : index
    %140 = vector.load %arg11[%c6_104, %c24_105] : memref<8x32xf32, #tpu.memory_space<vmem>>, vector<1x8xf32>
    tpu.vector_store %arg11[%c6_104, %c24_105], %139 {strides = array<i32>} : memref<8x32xf32, #tpu.memory_space<vmem>>, vector<1x8xf32>,
    %141 = vector.extract_strided_slice %132 {offsets = [4, 0], sizes = [1, 8], strides = [1, 1]} : vector<8x8xf32> to vector<1x8xf32>
    %c7 = arith.constant 7 : index
    %c0_106 = arith.constant 0 : index
    %142 = vector.load %arg11[%c7, %c0_106] : memref<8x32xf32, #tpu.memory_space<vmem>>, vector<1x8xf32>
    tpu.vector_store %arg11[%c7, %c0_106], %141 {strides = array<i32>} : memref<8x32xf32, #tpu.memory_space<vmem>>, vector<1x8xf32>,
    %143 = vector.extract_strided_slice %132 {offsets = [5, 0], sizes = [1, 8], strides = [1, 1]} : vector<8x8xf32> to vector<1x8xf32>
    %c7_107 = arith.constant 7 : index
    %c8_108 = arith.constant 8 : index
    %144 = vector.load %arg11[%c7_107, %c8_108] : memref<8x32xf32, #tpu.memory_space<vmem>>, vector<1x8xf32>
    tpu.vector_store %arg11[%c7_107, %c8_108], %143 {strides = array<i32>} : memref<8x32xf32, #tpu.memory_space<vmem>>, vector<1x8xf32>,
    %145 = vector.extract_strided_slice %132 {offsets = [6, 0], sizes = [1, 8], strides = [1, 1]} : vector<8x8xf32> to vector<1x8xf32>
    %c7_109 = arith.constant 7 : index
    %c16_110 = arith.constant 16 : index
    %146 = vector.load %arg11[%c7_109, %c16_110] : memref<8x32xf32, #tpu.memory_space<vmem>>, vector<1x8xf32>
    tpu.vector_store %arg11[%c7_109, %c16_110], %145 {strides = array<i32>} : memref<8x32xf32, #tpu.memory_space<vmem>>, vector<1x8xf32>,
    %147 = vector.extract_strided_slice %132 {offsets = [7, 0], sizes = [1, 8], strides = [1, 1]} : vector<8x8xf32> to vector<1x8xf32>
    %c7_111 = arith.constant 7 : index
    %c24_112 = arith.constant 24 : index
    %148 = vector.load %arg11[%c7_111, %c24_112] : memref<8x32xf32, #tpu.memory_space<vmem>>, vector<1x8xf32>
    tpu.vector_store %arg11[%c7_111, %c24_112], %147 {strides = array<i32>} : memref<8x32xf32, #tpu.memory_space<vmem>>, vector<1x8xf32>,
    %c0_113 = arith.constant 0 : index
    %c0_114 = arith.constant 0 : index
    %149 = vector.load %arg11[%c0_113, %c0_114] : memref<8x32xf32, #tpu.memory_space<vmem>>, vector<8x32xf32>
    %150 = arith.truncf %149 : vector<8x32xf32> to vector<8x32xbf16>
    %c0_115 = arith.constant 0 : index
    %c0_116 = arith.constant 0 : index
    %151 = vector.load %arg4[%c0_115, %c0_116] : memref<32x32xbf16, #tpu.memory_space<vmem>>, vector<32x32xbf16>
    %cst_117 = arith.constant dense<0.000000e+00> : vector<8x32xf32>
    %152 = tpu.matmul %150, %151, %cst_117 {dimension_numbers = #tpu.dot_dimension_numbers<[1], [0], [0], [1], [0, 0, 1, 1], [], []>} : vector<8x32xbf16>, vector<32x32xbf16>, vector<8x32xf32> -> vector<8x32xf32>
    %c0_118 = arith.constant 0 : index
    %c0_119 = arith.constant 0 : index
    %153 = vector.load %arg5[%c0_118, %c0_119] : memref<1x32xf32, #tpu.memory_space<vmem>>, vector<1x32xf32>
    %154 = vector.broadcast %153 : vector<1x32xf32> to vector<8x32xf32>
    %155 = arith.addf %152, %154 : vector<8x32xf32>
    %c0_120 = arith.constant 0 : index
    %c0_121 = arith.constant 0 : index
    %c0_122 = arith.constant 0 : index
    %156 = vector.load %arg6[%c0_120, %c0_121, %c0_122] : memref<1x8x32xf32, #tpu.memory_space<vmem>>, vector<1x8x32xf32>
    %157 = vector.shape_cast %156 : vector<1x8x32xf32> to vector<8x32xf32>
    %158 = vector.shape_cast %155 : vector<8x32xf32> to vector<1x8x32xf32>
    tpu.vector_store %arg6[%c0_120, %c0_121, %c0_122], %158 {strides = array<i32>} : memref<1x8x32xf32, #tpu.memory_space<vmem>>, vector<1x8x32xf32>,
    return
  }
  func.func @transform_0(%arg0: i32) -> (i32, i32, i32) {
    %c0_i32 = arith.constant 0 : i32
    %c0_i32_0 = arith.constant 0 : i32
    %c0_i32_1 = arith.constant 0 : i32
    return %arg0, %c0_i32, %c0_i32_0 : i32, i32, i32
  }
  func.func @transform_1(%arg0: i32) -> (i32, i32) {
    %c0_i32 = arith.constant 0 : i32
    %c0_i32_0 = arith.constant 0 : i32
    %c0_i32_1 = arith.constant 0 : i32
    return %c0_i32, %c0_i32_0 : i32, i32
  }
  func.func @transform_2(%arg0: i32) -> (i32, i32) {
    %c0_i32 = arith.constant 0 : i32
    %c0_i32_0 = arith.constant 0 : i32
    %c0_i32_1 = arith.constant 0 : i32
    return %c0_i32, %c0_i32_0 : i32, i32
  }
  func.func @transform_3(%arg0: i32) -> (i32, i32) {
    %c0_i32 = arith.constant 0 : i32
    %c0_i32_0 = arith.constant 0 : i32
    %c0_i32_1 = arith.constant 0 : i32
    return %c0_i32, %c0_i32_0 : i32, i32
  }
  func.func @transform_4(%arg0: i32) -> (i32, i32) {
    %c0_i32 = arith.constant 0 : i32
    %c0_i32_0 = arith.constant 0 : i32
    %c0_i32_1 = arith.constant 0 : i32
    return %c0_i32, %c0_i32_0 : i32, i32
  }
  func.func @transform_5(%arg0: i32) -> (i32, i32, i32) {
    %c0_i32 = arith.constant 0 : i32
    %c0_i32_0 = arith.constant 0 : i32
    %c0_i32_1 = arith.constant 0 : i32
    return %arg0, %c0_i32, %c0_i32_0 : i32, i32, i32
  }
  func.func @transform_6(%arg0: i32) -> (i32, i32, i32, i32) {
    %c0_i32 = arith.constant 0 : i32
    %c0_i32_0 = arith.constant 0 : i32
    %c0_i32_1 = arith.constant 0 : i32
    %c0_i32_2 = arith.constant 0 : i32
    return %arg0, %c0_i32, %c0_i32_0, %c0_i32_1 : i32, i32, i32, i32
  }
}

</mosaic_0001>

<llo_original>
// kernel: tpu_custom_call.1
$region0: #{tpu_custom_call.1}
  #allocation0 [shape = 'u32[]', space=smem, size = 0x4, offset = 0x4, fixed_abs, tag = 'smem constant byte address 0x4 - core index']
  #allocation1 [shape = 'u32[144,128]{1,0:T(1,128)}', space=vmem, size = 0x12000, scoped, tag = 'internal scratch']
  #allocation2 [shape = 'f32[4,8,8]{2,1,0:T(8,128)}', space=vmem, size = 0x4000, scoped, tag = 'scratch operand']
  #allocation3 [shape = 'f32[4,8,8]{2,1,0:T(8,128)}', space=vmem, size = 0x4000, scoped, tag = 'scratch operand']
  #allocation4 [shape = 'f32[4,8,8]{2,1,0:T(8,128)}', space=vmem, size = 0x4000, scoped, tag = 'scratch operand']
  #allocation5 [shape = 'f32[8,32]{1,0:T(8,128)}', space=vmem, size = 0x1000, scoped, tag = 'scratch operand']
  %s0 = inlined_call_operand.hbm [shape: bf16[2,8,32], index: 0, kind: input, shape index: {}]
  %s1 = inlined_call_operand.hbm [shape: bf16[32,96], index: 1, kind: input, shape index: {}]
  %s2 = inlined_call_operand.vmem [shape: f32[1,96], index: 2, kind: input, shape index: {}]
  %s3 = inlined_call_operand.hbm [shape: bf16[32,32], index: 3, kind: input, shape index: {}]
  %s4 = inlined_call_operand.vmem [shape: f32[1,32], index: 4, kind: input, shape index: {}]
  %s5 = inlined_call_operand.hbm [shape: f32[2,8,32], index: 5, kind: output, shape index: {0}]
  %s6 = inlined_call_operand.hbm [shape: f32[2,4,8,8], index: 6, kind: output, shape index: {1}]
  %7 = xla_tuple %s5, %s6
  %s8 = sld [smem:[#allocation0]]
  $region73: #{tpu_custom_call.1} parent=0
    _
  %s10 = ssub.s32 1, %s8
  %s11 = scalar_select 0, %s10, %s8
  $region1: #{tpu_custom_call.1} parent=0
    #allocation6 [shape = 'u8[4096]{0}', space=vmem, size = 0x1000, scoped, tag = 'input window, operand 0']
    #allocation7 [shape = 's32[2]{0}', space=sflag, size = 0x8, scoped, tag = 'scoped memory for tpu_custom_call.1']
    #allocation8 [shape = 's32[2]{0}', space=sflag, size = 0x8, scoped, tag = 'scoped memory for tpu_custom_call.1']
    #allocation9 [shape = 'u8[8192]{0}', space=vmem, size = 0x2000, scoped, tag = 'input window, operand 1, single buffered']
    #allocation10 [shape = 's32[1]{0}', space=sflag, size = 0x4, scoped, tag = 'scoped memory for tpu_custom_call.1']
    #allocation11 [shape = 'u8[8192]{0}', space=vmem, size = 0x2000, scoped, tag = 'input window, operand 3, single buffered']
    #allocation12 [shape = 'u8[8192]{0}', space=vmem, size = 0x2000, scoped, tag = 'output window, operand 0']
    #allocation13 [shape = 'u8[32768]{0}', space=vmem, size = 0x8000, scoped, tag = 'output window, operand 1']
    #allocation14 [shape = 's32[2]{0}', space=sflag, size = 0x8, scoped, tag = 'scoped memory for tpu_custom_call.1']
    %12 = vsyncpa [#allocation7], 0
    %s13 = scalar_lea.sflag [#allocation7], 1
    %14 = vsyncpa %s13, 0
    %15 = vsyncpa [#allocation10], 0
    %16 = vsyncpa [#allocation8], 0
    %s17 = scalar_lea.sflag [#allocation8], 1
    %18 = vsyncpa %s17, 0
    %19 = vsyncpa [#allocation14], 0
    %s20 = scalar_lea.sflag [#allocation14], 1
    %21 = vsyncpa %s20, 0
    loop: start=0, step=1, limit=4
    $region2: #{tpu_custom_call.1} parent=1 // loop_pre_header
      _
    $region3: #{tpu_custom_call.1} parent=1 // loop_header
      %s23 = sphi 0, %s27
      %p24 = scmp.ge.s32.totalorder %s23, 4
      %s33 = sphi 0, %s35
      %s36 = sphi 0, %s33
      %s37 = sphi 0, %s36
      %s53 = sphi 0, %s37
      %s57 = sphi 0, %s57
      %s59 = sphi 0, %s57
      %s60 = sphi 0, %s59
      %s74 = sphi 0, %s60
      %s78 = sphi 0, %s78
      %s80 = sphi 0, %s78
      %s81 = sphi 0, %s80
      %s95 = sphi 0, %s81
      %s99 = sphi 0, %s99
      %s101 = sphi 0, %s99
      %s102 = sphi 0, %s101
      %s116 = sphi 0, %s102
      %s120 = sphi 0, %s120
      %s122 = sphi 0, %s120
      %s123 = sphi 0, %s122
      %s137 = sphi 0, %s123
      %s143 = sphi 0, %s145
      %s146 = sphi 0, %s143
      %s147 = sphi 0, %s146
      %s163 = sphi 0, %s147
      %s169 = sphi 0, %s171
      %s172 = sphi 0, %s169
      %s173 = sphi 0, %s172
      %s189 = sphi 0, %s173
    $region4: #{tpu_custom_call.1} parent=1 // loop_header_branch
      %26 = sbr.rel (%p24) target = $region8
    $region5: #{tpu_custom_call.1} parent=1 // loop_body
      %s28 = ssub.s32 %s23, 1
      %s29 = ssub.s32 %s23, 2
      %s30 = sadd.s32 %s23, 1
      %s31 = ssub.s32 %s23, %s30
      %p32 = scmp.eq.s32.totalorder %s31, 0
      %s34 = sadd.s32 %s33, 1
      %s35 = scalar_select %p32, %s33, %s34
      %p38 = pneg %p32
      %p39 = scmp.eq.s32.totalorder %s23, 1
      %p40 = por %p38, %p39
      %p41 = scmp.ne.s32.totalorder %s33, %s36
      %p42 = scmp.eq.s32.totalorder %s23, 0
      %p43 = por %p41, %p42
      %p44 = scmp.ne.s32.totalorder %s33, %s36
      %p45 = scmp.eq.s32.totalorder %s28, 1
      %p46 = por %p44, %p45
      %p47 = scmp.ne.s32.totalorder %s36, %s37
      %p48 = scmp.eq.s32.totalorder %s28, 0
      %p49 = por %p47, %p48
      %p50 = scmp.ne.s32.totalorder %s36, %s37
      %p51 = scmp.eq.s32.totalorder %s29, 1
      %p52 = por %p50, %p51
      %p54 = scmp.ne.s32.totalorder %s37, %s53
      %p55 = scmp.eq.s32.totalorder %s29, 0
      %p56 = por %p54, %p55
      %s58 = sadd.s32 %s57, 1
      %p61 = scmp.eq.s32.totalorder %s23, 1
      %p62 = scmp.ne.s32.totalorder %s57, %s59
      %p63 = scmp.eq.s32.totalorder %s23, 0
      %p64 = por %p62, %p63
      %p65 = scmp.ne.s32.totalorder %s57, %s59
      %p66 = scmp.eq.s32.totalorder %s28, 1
      %p67 = por %p65, %p66
      %p68 = scmp.ne.s32.totalorder %s59, %s60
      %p69 = scmp.eq.s32.totalorder %s28, 0
      %p70 = por %p68, %p69
      %p71 = scmp.ne.s32.totalorder %s59, %s60
      %p72 = scmp.eq.s32.totalorder %s29, 1
      %p73 = por %p71, %p72
      %p75 = scmp.ne.s32.totalorder %s60, %s74
      %p76 = scmp.eq.s32.totalorder %s29, 0
      %p77 = por %p75, %p76
      %s79 = sadd.s32 %s78, 1
      %p82 = scmp.eq.s32.totalorder %s23, 1
      %p83 = scmp.ne.s32.totalorder %s78, %s80
      %p84 = scmp.eq.s32.totalorder %s23, 0
      %p85 = por %p83, %p84
      %p86 = scmp.ne.s32.totalorder %s78, %s80
      %p87 = scmp.eq.s32.totalorder %s28, 1
      %p88 = por %p86, %p87
      %p89 = scmp.ne.s32.totalorder %s80, %s81
      %p90 = scmp.eq.s32.totalorder %s28, 0
      %p91 = por %p89, %p90
      %p92 = scmp.ne.s32.totalorder %s80, %s81
      %p93 = scmp.eq.s32.totalorder %s29, 1
      %p94 = por %p92, %p93
      %p96 = scmp.ne.s32.totalorder %s81, %s95
      %p97 = scmp.eq.s32.totalorder %s29, 0
      %p98 = por %p96, %p97
      %s100 = sadd.s32 %s99, 1
      %p103 = scmp.eq.s32.totalorder %s23, 1
      %p104 = scmp.ne.s32.totalorder %s99, %s101
      %p105 = scmp.eq.s32.totalorder %s23, 0
      %p106 = por %p104, %p105
      %p107 = scmp.ne.s32.totalorder %s99, %s101
      %p108 = scmp.eq.s32.totalorder %s28, 1
      %p109 = por %p107, %p108
      %p110 = scmp.ne.s32.totalorder %s101, %s102
      %p111 = scmp.eq.s32.totalorder %s28, 0
      %p112 = por %p110, %p111
      %p113 = scmp.ne.s32.totalorder %s101, %s102
      %p114 = scmp.eq.s32.totalorder %s29, 1
      %p115 = por %p113, %p114
      %p117 = scmp.ne.s32.totalorder %s102, %s116
      %p118 = scmp.eq.s32.totalorder %s29, 0
      %p119 = por %p117, %p118
      %s121 = sadd.s32 %s120, 1
      %p124 = scmp.eq.s32.totalorder %s23, 1
      %p125 = scmp.ne.s32.totalorder %s120, %s122
      %p126 = scmp.eq.s32.totalorder %s23, 0
      %p127 = por %p125, %p126
      %p128 = scmp.ne.s32.totalorder %s120, %s122
      %p129 = scmp.eq.s32.totalorder %s28, 1
      %p130 = por %p128, %p129
      %p131 = scmp.ne.s32.totalorder %s122, %s123
      %p132 = scmp.eq.s32.totalorder %s28, 0
      %p133 = por %p131, %p132
      %p134 = scmp.ne.s32.totalorder %s122, %s123
      %p135 = scmp.eq.s32.totalorder %s29, 1
      %p136 = por %p134, %p135
      %p138 = scmp.ne.s32.totalorder %s123, %s137
      %p139 = scmp.eq.s32.totalorder %s29, 0
      %p140 = por %p138, %p139
      %s141 = ssub.s32 %s23, %s30
      %p142 = scmp.eq.s32.totalorder %s141, 0
      %s144 = sadd.s32 %s143, 1
      %s145 = scalar_select %p142, %s143, %s144
      %p148 = pneg %p142
      %p149 = scmp.eq.s32.totalorder %s23, 1
      %p150 = por %p148, %p149
      %p151 = scmp.ne.s32.totalorder %s143, %s146
      %p152 = scmp.eq.s32.totalorder %s23, 0
      %p153 = por %p151, %p152
      %p154 = scmp.ne.s32.totalorder %s143, %s146
      %p155 = scmp.eq.s32.totalorder %s28, 1
      %p156 = por %p154, %p155
      %p157 = scmp.ne.s32.totalorder %s146, %s147
      %p158 = scmp.eq.s32.totalorder %s28, 0
      %p159 = por %p157, %p158
      %p160 = scmp.ne.s32.totalorder %s146, %s147
      %p161 = scmp.eq.s32.totalorder %s29, 1
      %p162 = por %p160, %p161
      %p164 = scmp.ne.s32.totalorder %s147, %s163
      %p165 = scmp.eq.s32.totalorder %s29, 0
      %p166 = por %p164, %p165
      %s167 = ssub.s32 %s23, %s30
      %p168 = scmp.eq.s32.totalorder %s167, 0
      %s170 = sadd.s32 %s169, 1
      %s171 = scalar_select %p168, %s169, %s170
      %p174 = pneg %p168
      %p175 = scmp.eq.s32.totalorder %s23, 1
      %p176 = por %p174, %p175
      %p177 = scmp.ne.s32.totalorder %s169, %s172
      %p178 = scmp.eq.s32.totalorder %s23, 0
      %p179 = por %p177, %p178
      %p180 = scmp.ne.s32.totalorder %s169, %s172
      %p181 = scmp.eq.s32.totalorder %s28, 1
      %p182 = por %p180, %p181
      %p183 = scmp.ne.s32.totalorder %s172, %s173
      %p184 = scmp.eq.s32.totalorder %s28, 0
      %p185 = por %p183, %p184
      %p186 = scmp.ne.s32.totalorder %s172, %s173
      %p187 = scmp.eq.s32.totalorder %s29, 1
      %p188 = por %p186, %p187
      %p190 = scmp.ne.s32.totalorder %s173, %s189
      %p191 = scmp.eq.s32.totalorder %s29, 0
      %p192 = por %p190, %p191
      %p193 = scmp.le.s32.totalorder 1, %s23
      %p194 = scmp.lt.s32.totalorder %s23, 3
      %p195 = pnand %p193, %p194
      %p196 = pneg %p195
      // Predicated region
      $region9: #{tpu_custom_call.1} parent=5 // pred_check
        _
      $region10: #{tpu_custom_call.1} parent=5 // pred_check_branch
        %198 = sbr.rel (%p195) target = $region12
      $region11: #{tpu_custom_call.1} parent=5 // pred_region
        %s199 = ssub.s32 %s23, 1
        // Predicated region
        $region13: #{tpu_custom_call.1} parent=11 // pred_check
          %p200 = pneg %p70
        $region14: #{tpu_custom_call.1} parent=11 // pred_check_branch
          %202 = sbr.rel (%p200) target = $region16
        $region15: #{tpu_custom_call.1} parent=11 // pred_region
          %s204 = ssub.s32 256, 256
          %205 = vsyncadd [#allocation10], %s204
          %s206 = sshll.u32 [#allocation9], 4
          %s207 = int_to_ptr.vmem [resolvable:$true] %s206
          %212 = dma.hbm_to_vmem [thread:$0]  %s1, 256, %s207, [#allocation10], 64, 64, 4
        $region16: #{tpu_custom_call.1} parent=11 // pred_fallthru
          _
        // Predicated region
        $region17: #{tpu_custom_call.1} parent=11 // pred_check
          %p213 = pneg %p91
        $region18: #{tpu_custom_call.1} parent=11 // pred_check_branch
          %215 = sbr.rel (%p213) target = $region20
        $region19: #{tpu_custom_call.1} parent=11 // pred_region
          _
        $region20: #{tpu_custom_call.1} parent=11 // pred_fallthru
          _
        // Predicated region
        $region21: #{tpu_custom_call.1} parent=11 // pred_check
          %p216 = pneg %p112
        $region22: #{tpu_custom_call.1} parent=11 // pred_check_branch
          %218 = sbr.rel (%p216) target = $region24
        $region23: #{tpu_custom_call.1} parent=11 // pred_region
          %s220 = ssub.s32 256, 256
          %221 = vsyncadd [#allocation10], %s220
          %s222 = sshll.u32 [#allocation11], 4
          %s223 = int_to_ptr.vmem [resolvable:$true] %s222
          %228 = dma.hbm_to_vmem [thread:$0]  %s3, 256, %s223, [#allocation10], 64, 64, 4
        $region24: #{tpu_custom_call.1} parent=11 // pred_fallthru
          _
        // Predicated region
        $region25: #{tpu_custom_call.1} parent=11 // pred_check
          %p229 = pneg %p133
        $region26: #{tpu_custom_call.1} parent=11 // pred_check_branch
          %231 = sbr.rel (%p229) target = $region28
        $region27: #{tpu_custom_call.1} parent=11 // pred_region
          _
        $region28: #{tpu_custom_call.1} parent=11 // pred_fallthru
          _
      $region12: #{tpu_custom_call.1} parent=5 // pred_fallthru
        _
      %p232 = scmp.lt.s32.totalorder %s23, 2
      // Predicated region
      $region29: #{tpu_custom_call.1} parent=5 // pred_check
        %p233 = pneg %p232
      $region30: #{tpu_custom_call.1} parent=5 // pred_check_branch
        %235 = sbr.rel (%p233) target = $region32
      $region31: #{tpu_custom_call.1} parent=5 // pred_region
        // Predicated region
        $region33: #{tpu_custom_call.1} parent=31 // pred_check
          %p236 = pneg %p43
        $region34: #{tpu_custom_call.1} parent=31 // pred_check_branch
          %238 = sbr.rel (%p236) target = $region36
        $region35: #{tpu_custom_call.1} parent=31 // pred_region
          %s239 = sand.u32 %s33, 1
          %s240 = scalar_lea.sflag [#allocation7], %s239
          %s241 = sand.u32 %s33, 1
          %s242 = smul.addr %s241, 4
          %s243 = scalar_lea.vmem [#allocation6], %s242
          %s245 = ssub.s32 64, 64
          %246 = vsyncadd %s240, %s245
          %s247 = smul.addr %s23, 64
          %s248 = scalar_lea.hbm %s0, %s247
          %s250 = sshll.u32 %s243, 4
          %s251 = int_to_ptr.vmem [resolvable:$true] %s250
          %253 = dma.hbm_to_vmem [thread:$0]  %s248, 64, %s251, %s240
        $region36: #{tpu_custom_call.1} parent=31 // pred_fallthru
          _
      $region32: #{tpu_custom_call.1} parent=5 // pred_fallthru
        _
      %p254 = scmp.le.s32.totalorder 1, %s23
      %p255 = scmp.lt.s32.totalorder %s23, 3
      %p256 = pnand %p254, %p255
      %p257 = pneg %p256
      // Predicated region
      $region37: #{tpu_custom_call.1} parent=5 // pred_check
        _
      $region38: #{tpu_custom_call.1} parent=5 // pred_check_branch
        %259 = sbr.rel (%p256) target = $region40
      $region39: #{tpu_custom_call.1} parent=5 // pred_region
        %s260 = ssub.s32 %s23, 1
        %s261 = sand.u32 %s36, 1
        %s262 = scalar_lea.sflag [#allocation7], %s261
        %s263 = sand.u32 %s36, 1
        %s264 = smul.addr %s263, 4
        %s265 = scalar_lea.vmem [#allocation6], %s264
        // Predicated region
        $region41: #{tpu_custom_call.1} parent=39 // pred_check
          %p266 = pneg %p49
        $region42: #{tpu_custom_call.1} parent=39 // pred_check_branch
          %268 = sbr.rel (%p266) target = $region44
        $region43: #{tpu_custom_call.1} parent=39 // pred_region
          %269 = dma.done %s262, 64
        $region44: #{tpu_custom_call.1} parent=39 // pred_fallthru
          _
        // Predicated region
        $region45: #{tpu_custom_call.1} parent=39 // pred_check
          %p270 = pneg %p70
        $region46: #{tpu_custom_call.1} parent=39 // pred_check_branch
          %272 = sbr.rel (%p270) target = $region48
        $region47: #{tpu_custom_call.1} parent=39 // pred_region
          %273 = dma.done [#allocation10], 256
        $region48: #{tpu_custom_call.1} parent=39 // pred_fallthru
          _
        // Predicated region
        $region49: #{tpu_custom_call.1} parent=39 // pred_check
          %p274 = pneg %p112
        $region50: #{tpu_custom_call.1} parent=39 // pred_check_branch
          %276 = sbr.rel (%p274) target = $region52
        $region51: #{tpu_custom_call.1} parent=39 // pred_region
          %277 = dma.done [#allocation10], 256
        $region52: #{tpu_custom_call.1} parent=39 // pred_fallthru
          _
        %s278 = sand.u32 %s36, 1
        %s279 = scalar_lea.sflag [#allocation7], %s278
        %s280 = sand.u32 %s36, 1
        %s281 = smul.addr %s280, 4
        %s282 = scalar_lea.vmem [#allocation6], %s281
        %p283 = pneg %p49
        %p284 = pneg %p46
        %p285 = pneg %p70
        %p286 = pneg %p67
        %p287 = pneg %p91
        %p288 = pneg %p88
        %p289 = pneg %p112
        %p290 = pneg %p109
        %p291 = pneg %p133
        %p292 = pneg %p130
        %p293 = pneg %p159
        %p294 = pneg %p156
        %s295 = sand.u32 %s146, 1
        %s296 = scalar_lea.sflag [#allocation8], %s295
        %s297 = sand.u32 %s146, 1
        %s298 = smul.addr %s297, 8
        %s299 = scalar_lea.vmem [#allocation12], %s298
        %p300 = pneg %p185
        %p301 = pneg %p182
        %s302 = sand.u32 %s172, 1
        %s303 = scalar_lea.sflag [#allocation14], %s302
        %s304 = sand.u32 %s172, 1
        %s305 = smul.addr %s304, 32
        %s306 = scalar_lea.vmem [#allocation13], %s305
        %v308 = vld [vmem:[%s265] sm:$0xf]
        %v309 = vld [vmem:[#allocation9] sm:$0xf]
        %v310 = vld [vmem:[#allocation9 + $0x4] sm:$0xf]
        %v311 = vld [vmem:[#allocation9 + $0x8] sm:$0xf]
        %v312 = vld [vmem:[#allocation9 + $0xc] sm:$0xf]
        %v313 = vld [vmem:[%s2] sm:$0x1]
        %v315 = vlaneseq
        %v316 = vshrl.u32 %v315, 7
        %v317 = vsub.s32 0, %v316
        %v318 = vrot.slane %v313, %v317
        %v324 = vunpack.c.l.b16 %v309
        %v325 = vunpack.c.l.b16 %v310
        %v326 = vunpack.c.l.b16 %v311
        %v327 = vunpack.c.l.b16 %v312
        %v328 = vpack.c.b16 %v325, %v324
        %v329 = vpack.c.b16 %v327, %v326
        %vm332 = vcmask 261120
        %v334 = vsel %vm332, %v308, 0
        %336 = vmatprep.subr.bf16.mxu0 0
        %337 = vmatpush1.bf16.msra.mxu0 0
        %338 = vmatprep.subr.bf16.mxu0 0
        %339 = vmatpush1.bf16.msra.mxu0 0
        %340 = vmatprep.subr.bf16.mxu0 0
        %341 = vmatpush1.bf16.msra.mxu0 0
        %342 = vmatprep.subr.bf16.mxu0 0
        %343 = vmatpush1.bf16.msra.mxu0 0
        %344 = vmatprep.subr.bf16.mxu0 0
        %345 = vmatpush1.bf16.msra.mxu0 0
        %346 = vmatprep.subr.bf16.mxu0 0
        %347 = vmatpush1.bf16.msra.mxu0 0
        %348 = vmatprep.subr.bf16.mxu0 0
        %349 = vmatpush1.bf16.msra.mxu0 %v329
        %350 = vmatprep.subr.bf16.mxu0 0
        %351 = vmatpush1.bf16.msra.mxu0 %v328
        %352 = vmatprep.subr.bf16.mxu0 0
        %353 = vmatpush2.bf16.msra.mxu0 0
        %354 = vmatprep.subr.bf16.mxu0 0
        %355 = vmatpush2.bf16.msra.mxu0 0
        %356 = vmatprep.subr.bf16.mxu0 0
        %357 = vmatpush2.bf16.msra.mxu0 0
        %358 = vmatprep.subr.bf16.mxu0 0
        %359 = vmatpush2.bf16.msra.mxu0 0
        %360 = vmatprep.subr.bf16.mxu0 0
        %361 = vmatpush2.bf16.msra.mxu0 0
        %362 = vmatprep.subr.bf16.mxu0 0
        %363 = vmatpush2.bf16.msra.mxu0 0
        %364 = vmatprep.subr.bf16.mxu0 0
        %365 = vmatpush2.bf16.msra.mxu0 0
        %366 = vmatprep.subr.bf16.mxu0 0
        %367 = vmatpush2.bf16.msra.mxu0 0
        %368 = vmatprep.mubr.bf16.mxu0 0
        %369 = vmatmul.mubr.bf16.gmra.mxu0 %v334
        %v370 = vpop.f32.mrf.mxu0
        %v371 = vadd.f32 %v318, %v370
        %v372 = vpop.f32.mrf.mxu0
        %v373 = vpop.f32.mrf.mxu0
        %v374 = vpop.f32.mrf.mxu0
        %375 = vdwg.mxu0
        %vm376 = vcmask 64512
        %377 = vst.msk [vmem:[#allocation2] sm:$0xff] %vm376, %v371
        %379 = vrot.lane.b32.xlu0 %v371, 96
        %v380 = vpop.permute.xlu0 %379
        %382 = vst.msk [vmem:[#allocation3] sm:$0xff] %vm376, %v380
        %383 = vrot.lane.b32.xlu0 %v371, 64
        %v384 = vpop.permute.xlu0 %383
        %386 = vst.msk [vmem:[#allocation4] sm:$0xff] %vm376, %v384
        %387 = vrot.lane.b32.xlu0 %v371, 120
        %v388 = vpop.permute.xlu0 %387
        %s390 = scalar_lea.vmem [#allocation2], 8
        %391 = vst.msk [vmem:[%s390] sm:$0xff] %vm376, %v388
        %392 = vrot.lane.b32.xlu0 %v371, 88
        %v393 = vpop.permute.xlu0 %392
        %s395 = scalar_lea.vmem [#allocation3], 8
        %396 = vst.msk [vmem:[%s395] sm:$0xff] %vm376, %v393
        %397 = vrot.lane.b32.xlu0 %v371, 56
        %v398 = vpop.permute.xlu0 %397
        %s400 = scalar_lea.vmem [#allocation4], 8
        %401 = vst.msk [vmem:[%s400] sm:$0xff] %vm376, %v398
        %402 = vrot.lane.b32.xlu0 %v371, 112
        %v403 = vpop.permute.xlu0 %402
        %s405 = scalar_lea.vmem [#allocation2], 16
        %406 = vst.msk [vmem:[%s405] sm:$0xff] %vm376, %v403
        %407 = vrot.lane.b32.xlu0 %v371, 80
        %v408 = vpop.permute.xlu0 %407
        %s410 = scalar_lea.vmem [#allocation3], 16
        %411 = vst.msk [vmem:[%s410] sm:$0xff] %vm376, %v408
        %412 = vrot.lane.b32.xlu0 %v371, 48
        %v413 = vpop.permute.xlu0 %412
        %s415 = scalar_lea.vmem [#allocation4], 16
        %416 = vst.msk [vmem:[%s415] sm:$0xff] %vm376, %v413
        %417 = vrot.lane.b32.xlu0 %v371, 104
        %v418 = vpop.permute.xlu0 %417
        %s420 = scalar_lea.vmem [#allocation2], 24
        %421 = vst.msk [vmem:[%s420] sm:$0xff] %vm376, %v418
        %422 = vrot.lane.b32.xlu0 %v371, 72
        %v423 = vpop.permute.xlu0 %422
        %s425 = scalar_lea.vmem [#allocation3], 24
        %426 = vst.msk [vmem:[%s425] sm:$0xff] %vm376, %v423
        %427 = vrot.lane.b32.xlu0 %v371, 40
        %v428 = vpop.permute.xlu0 %427
        %s430 = scalar_lea.vmem [#allocation4], 24
        %431 = vst.msk [vmem:[%s430] sm:$0xff] %vm376, %v428
        %v432 = vld [vmem:[#allocation2] sm:$0xff]
        %v433 = vld [vmem:[#allocation2 + $0x8] sm:$0xff]
        %v434 = vld [vmem:[#allocation2 + $0x10] sm:$0xff]
        %v435 = vld [vmem:[#allocation2 + $0x18] sm:$0xff]
        %v436 = vpack.c.bf16 %v432, %v432
        %v437 = vpack.c.bf16 %v433, %v433
        %v438 = vpack.c.bf16 %v434, %v434
        %v439 = vpack.c.bf16 %v435, %v435
        %v440 = vld [vmem:[#allocation3] sm:$0xff]
        %v441 = vld [vmem:[#allocation3 + $0x8] sm:$0xff]
        %v442 = vld [vmem:[#allocation3 + $0x10] sm:$0xff]
        %v443 = vld [vmem:[#allocation3 + $0x18] sm:$0xff]
        %v444 = vpack.c.bf16 %v440, %v440
        %v445 = vpack.c.bf16 %v441, %v441
        %v446 = vpack.c.bf16 %v442, %v442
        %v447 = vpack.c.bf16 %v443, %v443
        %v448 = vld [vmem:[#allocation4] sm:$0xff]
        %v449 = vld [vmem:[#allocation4 + $0x8] sm:$0xff]
        %v450 = vld [vmem:[#allocation4 + $0x10] sm:$0xff]
        %v451 = vld [vmem:[#allocation4 + $0x18] sm:$0xff]
        %v452 = vpack.c.bf16 %v448, %v448
        %v453 = vpack.c.bf16 %v449, %v449
        %v454 = vpack.c.bf16 %v450, %v450
        %v455 = vpack.c.bf16 %v451, %v451
        %v457 = vsel %vm376, %v436, 0
        %v460 = vsel %vm376, %v444, 0
        %462 = vmatprep.subr.bf16.mxu0 0
        %463 = vmatpush1.bf16.xpose.msra.mxu0 0
        %464 = vmatprep.subr.bf16.mxu0 0
        %465 = vmatpush1.bf16.xpose.msra.mxu0 0
        %466 = vmatprep.subr.bf16.mxu0 0
        %467 = vmatpush1.bf16.xpose.msra.mxu0 0
        %468 = vmatprep.subr.bf16.mxu0 0
        %469 = vmatpush1.bf16.xpose.msra.mxu0 0
        %470 = vmatprep.subr.bf16.mxu0 0
        %471 = vmatpush1.bf16.xpose.msra.mxu0 0
        %472 = vmatprep.subr.bf16.mxu0 0
        %473 = vmatpush1.bf16.xpose.msra.mxu0 0
        %474 = vmatprep.subr.bf16.mxu0 0
        %475 = vmatpush1.bf16.xpose.msra.mxu0 0
        %476 = vmatprep.subr.bf16.mxu0 0
        %477 = vmatpush1.bf16.xpose.msra.mxu0 %v460
        %478 = vmatprep.subr.bf16.mxu0 0
        %479 = vmatpush2.bf16.xpose.msra.mxu0 0
        %480 = vmatprep.subr.bf16.mxu0 0
        %481 = vmatpush2.bf16.xpose.msra.mxu0 0
        %482 = vmatprep.subr.bf16.mxu0 0
        %483 = vmatpush2.bf16.xpose.msra.mxu0 0
        %484 = vmatprep.subr.bf16.mxu0 0
        %485 = vmatpush2.bf16.xpose.msra.mxu0 0
        %486 = vmatprep.subr.bf16.mxu0 0
        %487 = vmatpush2.bf16.xpose.msra.mxu0 0
        %488 = vmatprep.subr.bf16.mxu0 0
        %489 = vmatpush2.bf16.xpose.msra.mxu0 0
        %490 = vmatprep.subr.bf16.mxu0 0
        %491 = vmatpush2.bf16.xpose.msra.mxu0 0
        %492 = vmatprep.subr.bf16.mxu0 0
        %493 = vmatpush2.bf16.xpose.msra.mxu0 0
        %494 = vmatprep.mubr.bf16.mxu0 0
        %495 = vmatmul.mubr.bf16.gmra.mxu0 %v457
        %v496 = vpop.f32.mrf.mxu0
        %v497 = vadd.f32 0.0, %v496
        %v498 = vpop.f32.mrf.mxu0
        %v499 = vpop.f32.mrf.mxu0
        %v500 = vpop.f32.mrf.mxu0
        %501 = vdwg.mxu0
        %v503 = vsel %vm376, %v437, 0
        %v506 = vsel %vm376, %v445, 0
        %508 = vmatprep.subr.bf16.mxu0 0
        %509 = vmatpush1.bf16.xpose.msra.mxu0 0
        %510 = vmatprep.subr.bf16.mxu0 0
        %511 = vmatpush1.bf16.xpose.msra.mxu0 0
        %512 = vmatprep.subr.bf16.mxu0 0
        %513 = vmatpush1.bf16.xpose.msra.mxu0 0
        %514 = vmatprep.subr.bf16.mxu0 0
        %515 = vmatpush1.bf16.xpose.msra.mxu0 0
        %516 = vmatprep.subr.bf16.mxu0 0
        %517 = vmatpush1.bf16.xpose.msra.mxu0 0
        %518 = vmatprep.subr.bf16.mxu0 0
        %519 = vmatpush1.bf16.xpose.msra.mxu0 0
        %520 = vmatprep.subr.bf16.mxu0 0
        %521 = vmatpush1.bf16.xpose.msra.mxu0 0
        %522 = vmatprep.subr.bf16.mxu0 0
        %523 = vmatpush1.bf16.xpose.msra.mxu0 %v506
        %524 = vmatprep.subr.bf16.mxu0 0
        %525 = vmatpush2.bf16.xpose.msra.mxu0 0
        %526 = vmatprep.subr.bf16.mxu0 0
        %527 = vmatpush2.bf16.xpose.msra.mxu0 0
        %528 = vmatprep.subr.bf16.mxu0 0
        %529 = vmatpush2.bf16.xpose.msra.mxu0 0
        %530 = vmatprep.subr.bf16.mxu0 0
        %531 = vmatpush2.bf16.xpose.msra.mxu0 0
        %532 = vmatprep.subr.bf16.mxu0 0
        %533 = vmatpush2.bf16.xpose.msra.mxu0 0
        %534 = vmatprep.subr.bf16.mxu0 0
        %535 = vmatpush2.bf16.xpose.msra.mxu0 0
        %536 = vmatprep.subr.bf16.mxu0 0
        %537 = vmatpush2.bf16.xpose.msra.mxu0 0
        %538 = vmatprep.subr.bf16.mxu0 0
        %539 = vmatpush2.bf16.xpose.msra.mxu0 0
        %540 = vmatprep.mubr.bf16.mxu0 0
        %541 = vmatmul.mubr.bf16.gmra.mxu0 %v503
        %v542 = vpop.f32.mrf.mxu0
        %v543 = vadd.f32 0.0, %v542
        %v544 = vpop.f32.mrf.mxu0
        %v545 = vpop.f32.mrf.mxu0
        %v546 = vpop.f32.mrf.mxu0
        %547 = vdwg.mxu0
        %v549 = vsel %vm376, %v438, 0
        %v552 = vsel %vm376, %v446, 0
        %554 = vmatprep.subr.bf16.mxu0 0
        %555 = vmatpush1.bf16.xpose.msra.mxu0 0
        %556 = vmatprep.subr.bf16.mxu0 0
        %557 = vmatpush1.bf16.xpose.msra.mxu0 0
        %558 = vmatprep.subr.bf16.mxu0 0
        %559 = vmatpush1.bf16.xpose.msra.mxu0 0
        %560 = vmatprep.subr.bf16.mxu0 0
        %561 = vmatpush1.bf16.xpose.msra.mxu0 0
        %562 = vmatprep.subr.bf16.mxu0 0
        %563 = vmatpush1.bf16.xpose.msra.mxu0 0
        %564 = vmatprep.subr.bf16.mxu0 0
        %565 = vmatpush1.bf16.xpose.msra.mxu0 0
        %566 = vmatprep.subr.bf16.mxu0 0
        %567 = vmatpush1.bf16.xpose.msra.mxu0 0
        %568 = vmatprep.subr.bf16.mxu0 0
        %569 = vmatpush1.bf16.xpose.msra.mxu0 %v552
        %570 = vmatprep.subr.bf16.mxu0 0
        %571 = vmatpush2.bf16.xpose.msra.mxu0 0
        %572 = vmatprep.subr.bf16.mxu0 0
        %573 = vmatpush2.bf16.xpose.msra.mxu0 0
        %574 = vmatprep.subr.bf16.mxu0 0
        %575 = vmatpush2.bf16.xpose.msra.mxu0 0
        %576 = vmatprep.subr.bf16.mxu0 0
        %577 = vmatpush2.bf16.xpose.msra.mxu0 0
        %578 = vmatprep.subr.bf16.mxu0 0
        %579 = vmatpush2.bf16.xpose.msra.mxu0 0
        %580 = vmatprep.subr.bf16.mxu0 0
        %581 = vmatpush2.bf16.xpose.msra.mxu0 0
        %582 = vmatprep.subr.bf16.mxu0 0
        %583 = vmatpush2.bf16.xpose.msra.mxu0 0
        %584 = vmatprep.subr.bf16.mxu0 0
        %585 = vmatpush2.bf16.xpose.msra.mxu0 0
        %586 = vmatprep.mubr.bf16.mxu0 0
        %587 = vmatmul.mubr.bf16.gmra.mxu0 %v549
        %v588 = vpop.f32.mrf.mxu0
        %v589 = vadd.f32 0.0, %v588
        %v590 = vpop.f32.mrf.mxu0
        %v591 = vpop.f32.mrf.mxu0
        %v592 = vpop.f32.mrf.mxu0
        %593 = vdwg.mxu0
        %v595 = vsel %vm376, %v439, 0
        %v598 = vsel %vm376, %v447, 0
        %600 = vmatprep.subr.bf16.mxu0 0
        %601 = vmatpush1.bf16.xpose.msra.mxu0 0
        %602 = vmatprep.subr.bf16.mxu0 0
        %603 = vmatpush1.bf16.xpose.msra.mxu0 0
        %604 = vmatprep.subr.bf16.mxu0 0
        %605 = vmatpush1.bf16.xpose.msra.mxu0 0
        %606 = vmatprep.subr.bf16.mxu0 0
        %607 = vmatpush1.bf16.xpose.msra.mxu0 0
        %608 = vmatprep.subr.bf16.mxu0 0
        %609 = vmatpush1.bf16.xpose.msra.mxu0 0
        %610 = vmatprep.subr.bf16.mxu0 0
        %611 = vmatpush1.bf16.xpose.msra.mxu0 0
        %612 = vmatprep.subr.bf16.mxu0 0
        %613 = vmatpush1.bf16.xpose.msra.mxu0 0
        %614 = vmatprep.subr.bf16.mxu0 0
        %615 = vmatpush1.bf16.xpose.msra.mxu0 %v598
        %616 = vmatprep.subr.bf16.mxu0 0
        %617 = vmatpush2.bf16.xpose.msra.mxu0 0
        %618 = vmatprep.subr.bf16.mxu0 0
        %619 = vmatpush2.bf16.xpose.msra.mxu0 0
        %620 = vmatprep.subr.bf16.mxu0 0
        %621 = vmatpush2.bf16.xpose.msra.mxu0 0
        %622 = vmatprep.subr.bf16.mxu0 0
        %623 = vmatpush2.bf16.xpose.msra.mxu0 0
        %624 = vmatprep.subr.bf16.mxu0 0
        %625 = vmatpush2.bf16.xpose.msra.mxu0 0
        %626 = vmatprep.subr.bf16.mxu0 0
        %627 = vmatpush2.bf16.xpose.msra.mxu0 0
        %628 = vmatprep.subr.bf16.mxu0 0
        %629 = vmatpush2.bf16.xpose.msra.mxu0 0
        %630 = vmatprep.subr.bf16.mxu0 0
        %631 = vmatpush2.bf16.xpose.msra.mxu0 0
        %632 = vmatprep.mubr.bf16.mxu0 0
        %633 = vmatmul.mubr.bf16.gmra.mxu0 %v595
        %v634 = vpop.f32.mrf.mxu0
        %v635 = vadd.f32 0.0, %v634
        %v636 = vpop.f32.mrf.mxu0
        %v637 = vpop.f32.mrf.mxu0
        %v638 = vpop.f32.mrf.mxu0
        %639 = vdwg.mxu0
        %v640 = vsel %vm376, %v497, -inf
        %641 = vmax.xlane.f32.xlu0 %v640
        %v642 = vpop.xlane.xlu0 %641
        %v643 = vsel %vm376, %v543, -inf
        %644 = vmax.xlane.f32.xlu0 %v643
        %v645 = vpop.xlane.xlu0 %644
        %v646 = vsel %vm376, %v589, -inf
        %647 = vmax.xlane.f32.xlu0 %v646
        %v648 = vpop.xlane.xlu0 %647
        %v649 = vsel %vm376, %v635, -inf
        %650 = vmax.xlane.f32.xlu0 %v649
        %v651 = vpop.xlane.xlu0 %650
        %v652 = vsub.f32 %v497, %v642
        %v653 = vsub.f32 %v543, %v645
        %v654 = vsub.f32 %v589, %v648
        %v655 = vsub.f32 %v635, %v651
        %v656 = vmul.f32 %v652, 1.442695
        %v657 = vpow.pop %v656
        %v658 = vmul.f32 %v653, 1.442695
        %v659 = vpow.pop %v658
        %v660 = vmul.f32 %v654, 1.442695
        %v661 = vpow.pop %v660
        %v662 = vmul.f32 %v655, 1.442695
        %v663 = vpow.pop %v662
        %v664 = vsel %vm376, %v657, 0.0
        %665 = vadd.xlane.f32.xlu0 %v664
        %v666 = vpop.xlane.xlu0 %665
        %v667 = vsel %vm376, %v659, 0.0
        %668 = vadd.xlane.f32.xlu0 %v667
        %v669 = vpop.xlane.xlu0 %668
        %v670 = vsel %vm376, %v661, 0.0
        %671 = vadd.xlane.f32.xlu0 %v670
        %v672 = vpop.xlane.xlu0 %671
        %v673 = vsel %vm376, %v663, 0.0
        %674 = vadd.xlane.f32.xlu0 %v673
        %v675 = vpop.xlane.xlu0 %674
        %v676 = vrcp.pop %v666
        %v677 = vrcp.pop %v669
        %v678 = vrcp.pop %v672
        %v679 = vrcp.pop %v675
        %v680 = vmul.f32 %v657, %v676
        %v681 = vmul.f32 %v659, %v677
        %v682 = vmul.f32 %v661, %v678
        %v683 = vmul.f32 %v663, %v679
        %684 = vst.msk [vmem:[%s306] sm:$0xff] %vm376, %v680
        %685 = vst.msk [vmem:[%s306 + $0x8] sm:$0xff] %vm376, %v681
        %686 = vst.msk [vmem:[%s306 + $0x10] sm:$0xff] %vm376, %v682
        %687 = vst.msk [vmem:[%s306 + $0x18] sm:$0xff] %vm376, %v683
        %v688 = vpack.c.bf16 %v680, %v680
        %v689 = vpack.c.bf16 %v681, %v681
        %v690 = vpack.c.bf16 %v682, %v682
        %v691 = vpack.c.bf16 %v683, %v683
        %v693 = vsel %vm376, %v688, 0
        %vm695 = vcmask 1043456
        %v697 = vsel %vm695, %v452, 0
        %699 = vmatprep.subr.bf16.mxu0 0
        %700 = vmatpush1.bf16.msra.mxu0 0
        %701 = vmatprep.subr.bf16.mxu0 0
        %702 = vmatpush1.bf16.msra.mxu0 0
        %703 = vmatprep.subr.bf16.mxu0 0
        %704 = vmatpush1.bf16.msra.mxu0 0
        %705 = vmatprep.subr.bf16.mxu0 0
        %706 = vmatpush1.bf16.msra.mxu0 0
        %707 = vmatprep.subr.bf16.mxu0 0
        %708 = vmatpush1.bf16.msra.mxu0 0
        %709 = vmatprep.subr.bf16.mxu0 0
        %710 = vmatpush1.bf16.msra.mxu0 0
        %711 = vmatprep.subr.bf16.mxu0 0
        %712 = vmatpush1.bf16.msra.mxu0 0
        %713 = vmatprep.subr.bf16.mxu0 0
        %714 = vmatpush1.bf16.msra.mxu0 %v697
        %715 = vmatprep.subr.bf16.mxu0 0
        %716 = vmatpush2.bf16.msra.mxu0 0
        %717 = vmatprep.subr.bf16.mxu0 0
        %718 = vmatpush2.bf16.msra.mxu0 0
        %719 = vmatprep.subr.bf16.mxu0 0
        %720 = vmatpush2.bf16.msra.mxu0 0
        %721 = vmatprep.subr.bf16.mxu0 0
        %722 = vmatpush2.bf16.msra.mxu0 0
        %723 = vmatprep.subr.bf16.mxu0 0
        %724 = vmatpush2.bf16.msra.mxu0 0
        %725 = vmatprep.subr.bf16.mxu0 0
        %726 = vmatpush2.bf16.msra.mxu0 0
        %727 = vmatprep.subr.bf16.mxu0 0
        %728 = vmatpush2.bf16.msra.mxu0 0
        %729 = vmatprep.subr.bf16.mxu0 0
        %730 = vmatpush2.bf16.msra.mxu0 0
        %731 = vmatprep.mubr.bf16.mxu0 0
        %732 = vmatmul.mubr.bf16.gmra.mxu0 %v693
        %v733 = vpop.f32.mrf.mxu0
        %v734 = vadd.f32 0.0, %v733
        %v735 = vpop.f32.mrf.mxu0
        %v736 = vpop.f32.mrf.mxu0
        %v737 = vpop.f32.mrf.mxu0
        %738 = vdwg.mxu0
        %v740 = vsel %vm376, %v689, 0
        %v743 = vsel %vm695, %v453, 0
        %745 = vmatprep.subr.bf16.mxu0 0
        %746 = vmatpush1.bf16.msra.mxu0 0
        %747 = vmatprep.subr.bf16.mxu0 0
        %748 = vmatpush1.bf16.msra.mxu0 0
        %749 = vmatprep.subr.bf16.mxu0 0
        %750 = vmatpush1.bf16.msra.mxu0 0
        %751 = vmatprep.subr.bf16.mxu0 0
        %752 = vmatpush1.bf16.msra.mxu0 0
        %753 = vmatprep.subr.bf16.mxu0 0
        %754 = vmatpush1.bf16.msra.mxu0 0
        %755 = vmatprep.subr.bf16.mxu0 0
        %756 = vmatpush1.bf16.msra.mxu0 0
        %757 = vmatprep.subr.bf16.mxu0 0
        %758 = vmatpush1.bf16.msra.mxu0 0
        %759 = vmatprep.subr.bf16.mxu0 0
        %760 = vmatpush1.bf16.msra.mxu0 %v743
        %761 = vmatprep.subr.bf16.mxu0 0
        %762 = vmatpush2.bf16.msra.mxu0 0
        %763 = vmatprep.subr.bf16.mxu0 0
        %764 = vmatpush2.bf16.msra.mxu0 0
        %765 = vmatprep.subr.bf16.mxu0 0
        %766 = vmatpush2.bf16.msra.mxu0 0
        %767 = vmatprep.subr.bf16.mxu0 0
        %768 = vmatpush2.bf16.msra.mxu0 0
        %769 = vmatprep.subr.bf16.mxu0 0
        %770 = vmatpush2.bf16.msra.mxu0 0
        %771 = vmatprep.subr.bf16.mxu0 0
        %772 = vmatpush2.bf16.msra.mxu0 0
        %773 = vmatprep.subr.bf16.mxu0 0
        %774 = vmatpush2.bf16.msra.mxu0 0
        %775 = vmatprep.subr.bf16.mxu0 0
        %776 = vmatpush2.bf16.msra.mxu0 0
        %777 = vmatprep.mubr.bf16.mxu0 0
        %778 = vmatmul.mubr.bf16.gmra.mxu0 %v740
        %v779 = vpop.f32.mrf.mxu0
        %v780 = vadd.f32 0.0, %v779
        %v781 = vpop.f32.mrf.mxu0
        %v782 = vpop.f32.mrf.mxu0
        %v783 = vpop.f32.mrf.mxu0
        %784 = vdwg.mxu0
        %v786 = vsel %vm376, %v690, 0
        %v789 = vsel %vm695, %v454, 0
        %791 = vmatprep.subr.bf16.mxu0 0
        %792 = vmatpush1.bf16.msra.mxu0 0
        %793 = vmatprep.subr.bf16.mxu0 0
        %794 = vmatpush1.bf16.msra.mxu0 0
        %795 = vmatprep.subr.bf16.mxu0 0
        %796 = vmatpush1.bf16.msra.mxu0 0
        %797 = vmatprep.subr.bf16.mxu0 0
        %798 = vmatpush1.bf16.msra.mxu0 0
        %799 = vmatprep.subr.bf16.mxu0 0
        %800 = vmatpush1.bf16.msra.mxu0 0
        %801 = vmatprep.subr.bf16.mxu0 0
        %802 = vmatpush1.bf16.msra.mxu0 0
        %803 = vmatprep.subr.bf16.mxu0 0
        %804 = vmatpush1.bf16.msra.mxu0 0
        %805 = vmatprep.subr.bf16.mxu0 0
        %806 = vmatpush1.bf16.msra.mxu0 %v789
        %807 = vmatprep.subr.bf16.mxu0 0
        %808 = vmatpush2.bf16.msra.mxu0 0
        %809 = vmatprep.subr.bf16.mxu0 0
        %810 = vmatpush2.bf16.msra.mxu0 0
        %811 = vmatprep.subr.bf16.mxu0 0
        %812 = vmatpush2.bf16.msra.mxu0 0
        %813 = vmatprep.subr.bf16.mxu0 0
        %814 = vmatpush2.bf16.msra.mxu0 0
        %815 = vmatprep.subr.bf16.mxu0 0
        %816 = vmatpush2.bf16.msra.mxu0 0
        %817 = vmatprep.subr.bf16.mxu0 0
        %818 = vmatpush2.bf16.msra.mxu0 0
        %819 = vmatprep.subr.bf16.mxu0 0
        %820 = vmatpush2.bf16.msra.mxu0 0
        %821 = vmatprep.subr.bf16.mxu0 0
        %822 = vmatpush2.bf16.msra.mxu0 0
        %823 = vmatprep.mubr.bf16.mxu0 0
        %824 = vmatmul.mubr.bf16.gmra.mxu0 %v786
        %v825 = vpop.f32.mrf.mxu0
        %v826 = vadd.f32 0.0, %v825
        %v827 = vpop.f32.mrf.mxu0
        %v828 = vpop.f32.mrf.mxu0
        %v829 = vpop.f32.mrf.mxu0
        %830 = vdwg.mxu0
        %v832 = vsel %vm376, %v691, 0
        %v835 = vsel %vm695, %v455, 0
        %837 = vmatprep.subr.bf16.mxu0 0
        %838 = vmatpush1.bf16.msra.mxu0 0
        %839 = vmatprep.subr.bf16.mxu0 0
        %840 = vmatpush1.bf16.msra.mxu0 0
        %841 = vmatprep.subr.bf16.mxu0 0
        %842 = vmatpush1.bf16.msra.mxu0 0
        %843 = vmatprep.subr.bf16.mxu0 0
        %844 = vmatpush1.bf16.msra.mxu0 0
        %845 = vmatprep.subr.bf16.mxu0 0
        %846 = vmatpush1.bf16.msra.mxu0 0
        %847 = vmatprep.subr.bf16.mxu0 0
        %848 = vmatpush1.bf16.msra.mxu0 0
        %849 = vmatprep.subr.bf16.mxu0 0
        %850 = vmatpush1.bf16.msra.mxu0 0
        %851 = vmatprep.subr.bf16.mxu0 0
        %852 = vmatpush1.bf16.msra.mxu0 %v835
        %853 = vmatprep.subr.bf16.mxu0 0
        %854 = vmatpush2.bf16.msra.mxu0 0
        %855 = vmatprep.subr.bf16.mxu0 0
        %856 = vmatpush2.bf16.msra.mxu0 0
        %857 = vmatprep.subr.bf16.mxu0 0
        %858 = vmatpush2.bf16.msra.mxu0 0
        %859 = vmatprep.subr.bf16.mxu0 0
        %860 = vmatpush2.bf16.msra.mxu0 0
        %861 = vmatprep.subr.bf16.mxu0 0
        %862 = vmatpush2.bf16.msra.mxu0 0
        %863 = vmatprep.subr.bf16.mxu0 0
        %864 = vmatpush2.bf16.msra.mxu0 0
        %865 = vmatprep.subr.bf16.mxu0 0
        %866 = vmatpush2.bf16.msra.mxu0 0
        %867 = vmatprep.subr.bf16.mxu0 0
        %868 = vmatpush2.bf16.msra.mxu0 0
        %869 = vmatprep.mubr.bf16.mxu0 0
        %870 = vmatmul.mubr.bf16.gmra.mxu0 %v832
        %v871 = vpop.f32.mrf.mxu0
        %v872 = vadd.f32 0.0, %v871
        %v873 = vpop.f32.mrf.mxu0
        %v874 = vpop.f32.mrf.mxu0
        %v875 = vpop.f32.mrf.mxu0
        %876 = vdwg.mxu0
        %vm877 = vcmask 57344
        %878 = vst.msk [vmem:[#allocation5] sm:$0x1] %vm877, %v734
        %880 = vrot.lane.b32.xlu0 %v734, 8
        %v881 = vpop.permute.xlu0 %880
        %vm883 = vcmask 123969
        %884 = vst.msk [vmem:[#allocation5 - $0x1] sm:$0x2] %vm883, %v881
        %885 = vrot.lane.b32.xlu0 %v734, 16
        %v886 = vpop.permute.xlu0 %885
        %vm888 = vcmask 190594
        %889 = vst.msk [vmem:[#allocation5 - $0x2] sm:$0x4] %vm888, %v886
        %890 = vrot.lane.b32.xlu0 %v734, 24
        %v891 = vpop.permute.xlu0 %890
        %vm893 = vcmask 257219
        %894 = vst.msk [vmem:[#allocation5 - $0x3] sm:$0x8] %vm893, %v891
        %vm895 = vcmask 61444
        %896 = vst.msk [vmem:[#allocation5 - $0x3] sm:$0x10] %vm895, %v734
        %vm897 = vcmask 128069
        %898 = vst.msk [vmem:[#allocation5 - $0x4] sm:$0x20] %vm897, %v881
        %vm899 = vcmask 194694
        %900 = vst.msk [vmem:[#allocation5 - $0x5] sm:$0x40] %vm899, %v886
        %vm901 = vcmask 261319
        %902 = vst.msk [vmem:[#allocation5 - $0x6] sm:$0x80] %vm901, %v891
        %903 = vst.msk [vmem:[#allocation5 + $0x2] sm:$0x1] %vm877, %v780
        %905 = vrot.lane.b32.xlu0 %v780, 8
        %v906 = vpop.permute.xlu0 %905
        %908 = vst.msk [vmem:[#allocation5 + $0x1] sm:$0x2] %vm883, %v906
        %909 = vrot.lane.b32.xlu0 %v780, 16
        %v910 = vpop.permute.xlu0 %909
        %912 = vst.msk [vmem:[#allocation5] sm:$0x4] %vm888, %v910
        %913 = vrot.lane.b32.xlu0 %v780, 24
        %v914 = vpop.permute.xlu0 %913
        %916 = vst.msk [vmem:[#allocation5 - $0x1] sm:$0x8] %vm893, %v914
        %917 = vst.msk [vmem:[#allocation5 - $0x1] sm:$0x10] %vm895, %v780
        %918 = vst.msk [vmem:[#allocation5 - $0x2] sm:$0x20] %vm897, %v906
        %919 = vst.msk [vmem:[#allocation5 - $0x3] sm:$0x40] %vm899, %v910
        %920 = vst.msk [vmem:[#allocation5 - $0x4] sm:$0x80] %vm901, %v914
        %921 = vst.msk [vmem:[#allocation5 + $0x4] sm:$0x1] %vm877, %v826
        %923 = vrot.lane.b32.xlu0 %v826, 8
        %v924 = vpop.permute.xlu0 %923
        %926 = vst.msk [vmem:[#allocation5 + $0x3] sm:$0x2] %vm883, %v924
        %927 = vrot.lane.b32.xlu0 %v826, 16
        %v928 = vpop.permute.xlu0 %927
        %930 = vst.msk [vmem:[#allocation5 + $0x2] sm:$0x4] %vm888, %v928
        %931 = vrot.lane.b32.xlu0 %v826, 24
        %v932 = vpop.permute.xlu0 %931
        %934 = vst.msk [vmem:[#allocation5 + $0x1] sm:$0x8] %vm893, %v932
        %935 = vst.msk [vmem:[#allocation5 + $0x1] sm:$0x10] %vm895, %v826
        %936 = vst.msk [vmem:[#allocation5] sm:$0x20] %vm897, %v924
        %937 = vst.msk [vmem:[#allocation5 - $0x1] sm:$0x40] %vm899, %v928
        %938 = vst.msk [vmem:[#allocation5 - $0x2] sm:$0x80] %vm901, %v932
        %939 = vst.msk [vmem:[#allocation5 + $0x6] sm:$0x1] %vm877, %v872
        %941 = vrot.lane.b32.xlu0 %v872, 8
        %v942 = vpop.permute.xlu0 %941
        %944 = vst.msk [vmem:[#allocation5 + $0x5] sm:$0x2] %vm883, %v942
        %945 = vrot.lane.b32.xlu0 %v872, 16
        %v946 = vpop.permute.xlu0 %945
        %948 = vst.msk [vmem:[#allocation5 + $0x4] sm:$0x4] %vm888, %v946
        %949 = vrot.lane.b32.xlu0 %v872, 24
        %v950 = vpop.permute.xlu0 %949
        %952 = vst.msk [vmem:[#allocation5 + $0x3] sm:$0x8] %vm893, %v950
        %953 = vst.msk [vmem:[#allocation5 + $0x3] sm:$0x10] %vm895, %v872
        %954 = vst.msk [vmem:[#allocation5 + $0x2] sm:$0x20] %vm897, %v942
        %955 = vst.msk [vmem:[#allocation5 + $0x1] sm:$0x40] %vm899, %v946
        %956 = vst.msk [vmem:[#allocation5] sm:$0x80] %vm901, %v950
        %v957 = vld [vmem:[#allocation5] sm:$0xff]
        %v958 = vpack.c.bf16 %v957, %v957
        %v959 = vld [vmem:[#allocation11] sm:$0xf]
        %v960 = vld [vmem:[#allocation11 + $0x4] sm:$0xf]
        %v961 = vld [vmem:[#allocation11 + $0x8] sm:$0xf]
        %v962 = vld [vmem:[#allocation11 + $0xc] sm:$0xf]
        %v963 = vld [vmem:[%s4] sm:$0x1]
        %v965 = vlaneseq
        %v966 = vshrl.u32 %v965, 7
        %v967 = vsub.s32 0, %v966
        %v968 = vrot.slane %v963, %v967
        %v974 = vunpack.c.l.b16 %v959
        %v975 = vunpack.c.l.b16 %v960
        %v976 = vunpack.c.l.b16 %v961
        %v977 = vunpack.c.l.b16 %v962
        %v978 = vpack.c.b16 %v975, %v974
        %v979 = vpack.c.b16 %v977, %v976
        %v983 = vsel %vm332, %v958, 0
        %985 = vmatprep.subr.bf16.mxu0 0
        %986 = vmatpush1.bf16.msra.mxu0 0
        %987 = vmatprep.subr.bf16.mxu0 0
        %988 = vmatpush1.bf16.msra.mxu0 0
        %989 = vmatprep.subr.bf16.mxu0 0
        %990 = vmatpush1.bf16.msra.mxu0 0
        %991 = vmatprep.subr.bf16.mxu0 0
        %992 = vmatpush1.bf16.msra.mxu0 0
        %993 = vmatprep.subr.bf16.mxu0 0
        %994 = vmatpush1.bf16.msra.mxu0 0
        %995 = vmatprep.subr.bf16.mxu0 0
        %996 = vmatpush1.bf16.msra.mxu0 0
        %997 = vmatprep.subr.bf16.mxu0 0
        %998 = vmatpush1.bf16.msra.mxu0 %v979
        %999 = vmatprep.subr.bf16.mxu0 0
        %1000 = vmatpush1.bf16.msra.mxu0 %v978
        %1001 = vmatprep.subr.bf16.mxu0 0
        %1002 = vmatpush2.bf16.msra.mxu0 0
        %1003 = vmatprep.subr.bf16.mxu0 0
        %1004 = vmatpush2.bf16.msra.mxu0 0
        %1005 = vmatprep.subr.bf16.mxu0 0
        %1006 = vmatpush2.bf16.msra.mxu0 0
        %1007 = vmatprep.subr.bf16.mxu0 0
        %1008 = vmatpush2.bf16.msra.mxu0 0
        %1009 = vmatprep.subr.bf16.mxu0 0
        %1010 = vmatpush2.bf16.msra.mxu0 0
        %1011 = vmatprep.subr.bf16.mxu0 0
        %1012 = vmatpush2.bf16.msra.mxu0 0
        %1013 = vmatprep.subr.bf16.mxu0 0
        %1014 = vmatpush2.bf16.msra.mxu0 0
        %1015 = vmatprep.subr.bf16.mxu0 0
        %1016 = vmatpush2.bf16.msra.mxu0 0
        %1017 = vmatprep.mubr.bf16.mxu0 0
        %1018 = vmatmul.mubr.bf16.gmra.mxu0 %v983
        %v1019 = vpop.f32.mrf.mxu0
        %v1020 = vadd.f32 %v968, %v1019
        %v1021 = vpop.f32.mrf.mxu0
        %v1022 = vpop.f32.mrf.mxu0
        %v1023 = vpop.f32.mrf.mxu0
        %1024 = vdwg.mxu0
        %1025 = vst.msk [vmem:[%s299] sm:$0xff] %vm332, %v1020
        %s1026 = sand.u32 %s146, 1
        %s1027 = scalar_lea.sflag [#allocation8], %s1026
        %s1028 = sand.u32 %s146, 1
        %s1029 = smul.addr %s1028, 8
        %s1030 = scalar_lea.vmem [#allocation12], %s1029
        %s1031 = sand.u32 %s172, 1
        %s1032 = scalar_lea.sflag [#allocation14], %s1031
        %s1033 = sand.u32 %s172, 1
        %s1034 = smul.addr %s1033, 32
        %s1035 = scalar_lea.vmem [#allocation13], %s1034
        // Predicated region
        $region53: #{tpu_custom_call.1} parent=39 // pred_check
          %p1036 = pneg %p156
        $region54: #{tpu_custom_call.1} parent=39 // pred_check_branch
          %1038 = sbr.rel (%p1036) target = $region56
        $region55: #{tpu_custom_call.1} parent=39 // pred_region
          %s1040 = ssub.s32 128, 128
          %1041 = vsyncadd %s1027, %s1040
          %s1042 = smul.addr %s28, 128
          %s1043 = scalar_lea.hbm %s5, %s1042
          %s1045 = sshll.u32 %s1030, 4
          %s1046 = int_to_ptr.vmem [resolvable:$true] %s1045
          %1048 = dma.vmem_to_hbm [thread:$0]  %s1046, 128, %s1043, %s1027
        $region56: #{tpu_custom_call.1} parent=39 // pred_fallthru
          _
        // Predicated region
        $region57: #{tpu_custom_call.1} parent=39 // pred_check
          %p1049 = pneg %p182
        $region58: #{tpu_custom_call.1} parent=39 // pred_check_branch
          %1051 = sbr.rel (%p1049) target = $region60
        $region59: #{tpu_custom_call.1} parent=39 // pred_region
          %s1053 = ssub.s32 512, 512
          %1054 = vsyncadd %s1032, %s1053
          %s1055 = smul.addr %s28, 4
          %s1056 = smul.addr %s1055, 128
          %s1057 = scalar_lea.hbm %s6, %s1056
          %s1058 = sshll.u32 %s1035, 4
          %s1059 = int_to_ptr.vmem [resolvable:$true] %s1058
          %1064 = dma.vmem_to_hbm [thread:$0]  %s1059, 512, %s1057, %s1032, 128, 128, 8
        $region60: #{tpu_custom_call.1} parent=39 // pred_fallthru
          _
      $region40: #{tpu_custom_call.1} parent=5 // pred_fallthru
        _
      %p1065 = scmp.le.s32.totalorder 2, %s23
      // Predicated region
      $region61: #{tpu_custom_call.1} parent=5 // pred_check
        %p1066 = pneg %p1065
      $region62: #{tpu_custom_call.1} parent=5 // pred_check_branch
        %1068 = sbr.rel (%p1066) target = $region64
      $region63: #{tpu_custom_call.1} parent=5 // pred_region
        %s1069 = ssub.s32 %s23, 2
        // Predicated region
        $region65: #{tpu_custom_call.1} parent=63 // pred_check
          %p1070 = pneg %p162
        $region66: #{tpu_custom_call.1} parent=63 // pred_check_branch
          %1072 = sbr.rel (%p1070) target = $region68
        $region67: #{tpu_custom_call.1} parent=63 // pred_region
          %s1073 = sand.u32 %s147, 1
          %s1074 = scalar_lea.sflag [#allocation8], %s1073
          %s1075 = sand.u32 %s147, 1
          %s1076 = smul.addr %s1075, 8
          %s1077 = scalar_lea.vmem [#allocation12], %s1076
          %1078 = dma.done %s1074, 128
        $region68: #{tpu_custom_call.1} parent=63 // pred_fallthru
          _
        // Predicated region
        $region69: #{tpu_custom_call.1} parent=63 // pred_check
          %p1079 = pneg %p188
        $region70: #{tpu_custom_call.1} parent=63 // pred_check_branch
          %1081 = sbr.rel (%p1079) target = $region72
        $region71: #{tpu_custom_call.1} parent=63 // pred_region
          %s1082 = sand.u32 %s173, 1
          %s1083 = scalar_lea.sflag [#allocation14], %s1082
          %s1084 = sand.u32 %s173, 1
          %s1085 = smul.addr %s1084, 32
          %s1086 = scalar_lea.vmem [#allocation13], %s1085
          %1087 = dma.done %s1083, 512
        $region72: #{tpu_custom_call.1} parent=63 // pred_fallthru
          _
      $region64: #{tpu_custom_call.1} parent=5 // pred_fallthru
        _
    $region6: #{tpu_custom_call.1} parent=1 // loop_footer
      %s27 = sadd.s32 1, %s23
    $region7: #{tpu_custom_call.1} parent=1 // loop_footer_branch
      %22 = sbr.rel target = $region3
    $region8: #{tpu_custom_call.1} parent=1 // loop_exit
      _
    %1088 = vsyncpa [#allocation7], 1
    %s1089 = scalar_lea.sflag [#allocation7], 1
    %1090 = vsyncpa %s1089, 1
    %1091 = vsyncpa [#allocation10], 1
    %1092 = vsyncpa [#allocation8], 1
    %s1093 = scalar_lea.sflag [#allocation8], 1
    %1094 = vsyncpa %s1093, 1
    %1095 = vsyncpa [#allocation14], 1
    %s1096 = scalar_lea.sflag [#allocation14], 1
    %1097 = vsyncpa %s1096, 1

</llo_original>
